<compile_context>
chip_gen: v5e
topology: v5e:2x2
jax: 0.10.0
libtpu: 0.0.40
codegen_flags: <defaults>
</compile_context>

<pallas_src>
import functools

import jax
import jax.numpy as jnp
from jax.experimental import pallas as pl
from jax.experimental.pallas import tpu as pltpu


# -----------------------------------------------------------------------------
# Pallas kernel: full encoder recurrence + decoder recurrence + output Linear.
# -----------------------------------------------------------------------------
def _enc_dec_kernel(x_ref,       # (T, B, 1)   f32   input sequence, time-major
                    whh_ref,     # (2, H, 4H)  bf16  [enc W_hh^T ; dec W_hh^T], g-cols x2
                    slab_ref,    # (8, 4H)     f32   rows: e_wih, e_b, d_wih, d_b,
                                 #                         lin_w (padded), lin_b, 0, 0
                    out_ref):    # (T, B)      f32
    T, B, _ = x_ref.shape
    H = whh_ref.shape[1]

    x = x_ref[...]                                   # (T, B, 1)
    slab = slab_ref[...]                             # (8, 4H)
    ewhh = whh_ref[0]                                # (H, 4H) bf16
    dwhh = whh_ref[1]                                # (H, 4H) bf16

    # Hoisted input + bias contribution for every timestep: one broadcast VPU op per
    # phase, shape (T, B, 4H).  (g-gate columns already carry the x2 pre-scale.)
    enc_pre = x * slab[0] + slab[1]                  # (T, B, 4H)
    dec_pre = x * slab[2] + slab[3]                  # (T, B, 4H)

    def lstm_step(pre_t, h, c, whh):
        # pre_t: (B, 4H) f32; h, c: (B, H) f32; whh: (H, 4H) bf16.
        # Single-pass bf16 MXU matmul with lane-dense N = 4H output, f32 accumulation.
        gates = pre_t + jnp.dot(h.astype(jnp.bfloat16), whh,
                                preferred_element_type=jnp.float32)
        s = jax.nn.sigmoid(gates)                    # one EUP pass over the full vreg
        i = s[:, 0 * H:1 * H]                        # PyTorch gate order: i, f, g, o
        f = s[:, 1 * H:2 * H]
        g = 2.0 * s[:, 2 * H:3 * H] - 1.0            # tanh(x) = 2*sigmoid(2x) - 1
        o = s[:, 3 * H:4 * H]
        c_new = f * c + i * g
        h_new = o * jnp.tanh(c_new)
        return h_new, c_new

    h = jnp.zeros((B, H), jnp.float32)
    c = jnp.zeros((B, H), jnp.float32)

    # ---- encoder LSTM (context vector = final hidden state), fully unrolled ----
    for t in range(T):
        h, c = lstm_step(enc_pre[t], h, c, ewhh)

    # ---- decoder LSTMCell, teacher-forced on x[:, t, :]; h0 = context, c0 = 0 ----
    c = jnp.zeros((B, H), jnp.float32)
    hs = []
    for t in range(T):
        h, c = lstm_step(dec_pre[t], h, c, dwhh)
        hs.append(h)

    # ---- fused output Linear epilogue: one multiply + one lane reduce ----
    hs_all = jnp.stack(hs, axis=0)                   # (T, B, H)
    lw = slab[4, :H]                                 # (H,)
    lb = slab[5:6, 0:1]                              # (1, 1)
    out_ref[...] = jnp.sum(hs_all * lw, axis=-1) + lb          # (T, B)


# -----------------------------------------------------------------------------
# Wrapper: PyTorch-convention (B, T, 1) in / (B, T, 1) out.
# -----------------------------------------------------------------------------
@functools.partial(jax.jit, static_argnames=("hidden_size",))
def encoder_decoder_fc_forward(x, params, hidden_size):
    B, T, one = x.shape
    assert one == 1
    H = hidden_size
    assert H % 8 == 0, "hidden_size must be a multiple of 8 for TPU sublane tiling"

    x_tb1 = jnp.transpose(x, (1, 0, 2)).astype(jnp.float32)        # (T, B, 1)

    # g-gate columns pre-scaled by 2 so the kernel can derive tanh from the sigmoid.
    scale = jnp.concatenate([jnp.ones((H,), jnp.float32),
                             jnp.ones((H,), jnp.float32),
                             jnp.full((H,), 2.0, jnp.float32),
                             jnp.ones((H,), jnp.float32)])          # (4H,)

    e_wih = params["enc_w_ih"].reshape(-1) * scale
    e_b = (params["enc_b_ih"] + params["enc_b_hh"]) * scale
    d_wih = params["dec_w_ih"].reshape(-1) * scale
    d_b = (params["dec_b_ih"] + params["dec_b_hh"]) * scale
    lw_row = jnp.zeros((4 * H,), jnp.float32).at[:H].set(params["lin_w"].reshape(-1))
    lb_row = jnp.zeros((4 * H,), jnp.float32).at[0].set(params["lin_b"][0])
    zeros = jnp.zeros((4 * H,), jnp.float32)
    slab = jnp.stack([e_wih, e_b, d_wih, d_b, lw_row, lb_row, zeros, zeros], axis=0)

    # Recurrent weights pre-transposed, g-cols pre-scaled (x2 exact in bf16), bf16.
    e_whh = (params["enc_w_hh"].T * scale[None, :]).astype(jnp.bfloat16)   # (H, 4H)
    d_whh = (params["dec_w_hh"].T * scale[None, :]).astype(jnp.bfloat16)   # (H, 4H)
    whh_stack = jnp.stack([e_whh, d_whh], axis=0)                          # (2, H, 4H)

    vmem = pl.BlockSpec(memory_space=pltpu.MemorySpace.VMEM)
    out_tb = pl.pallas_call(
        _enc_dec_kernel,
        out_shape=jax.ShapeDtypeStruct((T, B), jnp.float32),
        in_specs=[vmem, vmem, vmem],
        out_specs=vmem,
    )(x_tb1, whh_stack, slab)

    return jnp.transpose(out_tb)[:, :, None]                       # (B, T, 1)


# -----------------------------------------------------------------------------
# Pure-JAX reference (mirrors the PyTorch training-mode forward) for validation.
# -----------------------------------------------------------------------------
def reference_forward(x, params, hidden_size):
    H = hidden_size
    B, T, _ = x.shape
    sig, tanh = jax.nn.sigmoid, jnp.tanh

    def cell(xt, h, c, wih, whh, bih, bhh):
        gates = xt @ wih.T + h @ whh.T + bih + bhh
        i = sig(gates[:, 0 * H:1 * H])
        f = sig(gates[:, 1 * H:2 * H])
        g = tanh(gates[:, 2 * H:3 * H])
        o = sig(gates[:, 3 * H:4 * H])
        c = f * c + i * g
        return o * tanh(c), c

    h = jnp.zeros((B, H), jnp.float32)
    c = jnp.zeros((B, H), jnp.float32)
    for t in range(T):
        h, c = cell(x[:, t, :], h, c,
                    params["enc_w_ih"], params["enc_w_hh"],
                    params["enc_b_ih"], params["enc_b_hh"])

    hx, cx = h, jnp.zeros((B, H), jnp.float32)
    outs = []
    for t in range(T):
        hx, cx = cell(x[:, t, :], hx, cx,
                      params["dec_w_ih"], params["dec_w_hh"],
                      params["dec_b_ih"], params["dec_b_hh"])
        outs.append(hx @ params["lin_w"].T + params["lin_b"])
    return jnp.stack(outs, axis=1)                                  # (B, T, 1)


def init_params(key, hidden_size):
    H = hidden_size
    k = 1.0 / jnp.sqrt(H)
    keys = jax.random.split(key, 10)
    u = lambda kk, shape: jax.random.uniform(kk, shape, jnp.float32, -k, k)
    return {
        "enc_w_ih": u(keys[0], (4 * H, 1)),
        "enc_w_hh": u(keys[1], (4 * H, H)),
        "enc_b_ih": u(keys[2], (4 * H,)),
        "enc_b_hh": u(keys[3], (4 * H,)),
        "dec_w_ih": u(keys[4], (4 * H, 1)),
        "dec_w_hh": u(keys[5], (4 * H, H)),
        "dec_b_ih": u(keys[6], (4 * H,)),
        "dec_b_hh": u(keys[7], (4 * H,)),
        "lin_w": u(keys[8], (1, H)),
        "lin_b": u(keys[9], (1,)),
    }


if __name__ == "__main__":
    B, T, H = 2, 8, 32
    enc_num_layers = 1
    assert enc_num_layers == 1, "forward is only valid for a single-layer encoder"

    key = jax.random.PRNGKey(0)
    kx, kp = jax.random.split(key)
    x = jax.random.normal(kx, (B, T, 1), jnp.float32)
    params = init_params(kp, H)

    out = encoder_decoder_fc_forward(x, params, H)
    out = jax.block_until_ready(out)

    ref = reference_forward(x, params, H)
    assert out.shape == (B, T, 1), out.shape
    # Tolerance loosened (vs. 2e-5) because the recurrent matmul now uses bf16 operands.
    max_err = float(jnp.max(jnp.abs(out - ref)))
    assert max_err < 2e-2, f"max err {max_err}"

    print("KERNEL_OK")
</pallas_src>

<mosaic_0001>
module attributes {stable_mosaic.version = 11 : i64} {
  func.func @_enc_dec_kernel(%arg0: memref<8x2x1xf32, #tpu.memory_space<vmem>>, %arg1: memref<2x32x128xbf16, #tpu.memory_space<vmem>>, %arg2: memref<8x128xf32, #tpu.memory_space<vmem>>, %arg3: memref<8x2xf32, #tpu.memory_space<vmem>>) attributes {dimension_semantics = [], scalar_prefetch = 0 : i64, scratch_operands = 0 : i64, tpu.core_type = #tpu.core_type<tc>} {
    %c0 = arith.constant 0 : index
    %c0_0 = arith.constant 0 : index
    %c0_1 = arith.constant 0 : index
    %0 = vector.load %arg0[%c0, %c0_0, %c0_1] : memref<8x2x1xf32, #tpu.memory_space<vmem>>, vector<8x2x1xf32>
    %c0_2 = arith.constant 0 : index
    %c0_3 = arith.constant 0 : index
    %1 = vector.load %arg2[%c0_2, %c0_3] : memref<8x128xf32, #tpu.memory_space<vmem>>, vector<8x128xf32>
    %c0_4 = arith.constant 0 : index
    %c0_5 = arith.constant 0 : index
    %c0_6 = arith.constant 0 : index
    %2 = vector.load %arg1[%c0_4, %c0_5, %c0_6] : memref<2x32x128xbf16, #tpu.memory_space<vmem>>, vector<1x32x128xbf16>
    %3 = vector.shape_cast %2 : vector<1x32x128xbf16> to vector<32x128xbf16>
    %c1 = arith.constant 1 : index
    %c0_7 = arith.constant 0 : index
    %c0_8 = arith.constant 0 : index
    %4 = vector.load %arg1[%c1, %c0_7, %c0_8] : memref<2x32x128xbf16, #tpu.memory_space<vmem>>, vector<1x32x128xbf16>
    %5 = vector.shape_cast %4 : vector<1x32x128xbf16> to vector<32x128xbf16>
    %6 = vector.extract_strided_slice %1 {offsets = [0, 0], sizes = [1, 128], strides = [1, 1]} : vector<8x128xf32> to vector<1x128xf32>
    %7 = vector.shape_cast %6 : vector<1x128xf32> to vector<128xf32>
    %8 = vector.shape_cast %7 : vector<128xf32> to vector<1x1x128xf32>
    %9 = vector.broadcast %0 : vector<8x2x1xf32> to vector<8x2x128xf32>
    %10 = vector.broadcast %8 : vector<1x1x128xf32> to vector<8x2x128xf32>
    %11 = arith.mulf %9, %10 : vector<8x2x128xf32>
    %12 = vector.extract_strided_slice %1 {offsets = [1, 0], sizes = [1, 128], strides = [1, 1]} : vector<8x128xf32> to vector<1x128xf32>
    %13 = vector.shape_cast %12 : vector<1x128xf32> to vector<128xf32>
    %14 = vector.shape_cast %13 : vector<128xf32> to vector<1x1x128xf32>
    %15 = vector.broadcast %14 : vector<1x1x128xf32> to vector<8x2x128xf32>
    %16 = arith.addf %11, %15 : vector<8x2x128xf32>
    %17 = vector.extract_strided_slice %1 {offsets = [2, 0], sizes = [1, 128], strides = [1, 1]} : vector<8x128xf32> to vector<1x128xf32>
    %18 = vector.shape_cast %17 : vector<1x128xf32> to vector<128xf32>
    %19 = vector.shape_cast %18 : vector<128xf32> to vector<1x1x128xf32>
    %20 = vector.broadcast %0 : vector<8x2x1xf32> to vector<8x2x128xf32>
    %21 = vector.broadcast %19 : vector<1x1x128xf32> to vector<8x2x128xf32>
    %22 = arith.mulf %20, %21 : vector<8x2x128xf32>
    %23 = vector.extract_strided_slice %1 {offsets = [3, 0], sizes = [1, 128], strides = [1, 1]} : vector<8x128xf32> to vector<1x128xf32>
    %24 = vector.shape_cast %23 : vector<1x128xf32> to vector<128xf32>
    %25 = vector.shape_cast %24 : vector<128xf32> to vector<1x1x128xf32>
    %26 = vector.broadcast %25 : vector<1x1x128xf32> to vector<8x2x128xf32>
    %27 = arith.addf %22, %26 : vector<8x2x128xf32>
    %cst = arith.constant 0.000000e+00 : f32
    %28 = vector.broadcast %cst : f32 to vector<2x32xf32>
    %cst_9 = arith.constant 0.000000e+00 : f32
    %29 = vector.broadcast %cst_9 : f32 to vector<2x32xf32>
    %30 = vector.extract_strided_slice %16 {offsets = [0, 0, 0], sizes = [1, 2, 128], strides = [1, 1, 1]} : vector<8x2x128xf32> to vector<1x2x128xf32>
    %31 = vector.shape_cast %30 : vector<1x2x128xf32> to vector<2x128xf32>
    %32 = arith.truncf %28 : vector<2x32xf32> to vector<2x32xbf16>
    %cst_10 = arith.constant dense<0.000000e+00> : vector<2x128xf32>
    %33 = tpu.matmul %32, %3, %cst_10 {dimension_numbers = #tpu.dot_dimension_numbers<[1], [0], [0], [1], [0, 0, 1, 1], [], []>} : vector<2x32xbf16>, vector<32x128xbf16>, vector<2x128xf32> -> vector<2x128xf32>
    %34 = arith.addf %31, %33 : vector<2x128xf32>
    %35 = arith.negf %34 : vector<2x128xf32>
    %36 = math.exp %35 : vector<2x128xf32>
    %cst_11 = arith.constant 1.000000e+00 : f32
    %37 = vector.broadcast %cst_11 : f32 to vector<2x128xf32>
    %38 = arith.addf %37, %36 : vector<2x128xf32>
    %39 = arith.divf %37, %38 : vector<2x128xf32>
    %40 = vector.extract_strided_slice %39 {offsets = [0, 0], sizes = [2, 32], strides = [1, 1]} : vector<2x128xf32> to vector<2x32xf32>
    %41 = vector.extract_strided_slice %39 {offsets = [0, 32], sizes = [2, 32], strides = [1, 1]} : vector<2x128xf32> to vector<2x32xf32>
    %42 = vector.extract_strided_slice %39 {offsets = [0, 64], sizes = [2, 32], strides = [1, 1]} : vector<2x128xf32> to vector<2x32xf32>
    %cst_12 = arith.constant 2.000000e+00 : f32
    %43 = vector.broadcast %cst_12 : f32 to vector<2x32xf32>
    %44 = arith.mulf %43, %42 : vector<2x32xf32>
    %cst_13 = arith.constant 1.000000e+00 : f32
    %45 = vector.broadcast %cst_13 : f32 to vector<2x32xf32>
    %46 = arith.subf %44, %45 : vector<2x32xf32>
    %47 = vector.extract_strided_slice %39 {offsets = [0, 96], sizes = [2, 32], strides = [1, 1]} : vector<2x128xf32> to vector<2x32xf32>
    %48 = arith.mulf %41, %29 : vector<2x32xf32>
    %49 = arith.mulf %40, %46 : vector<2x32xf32>
    %50 = arith.addf %48, %49 : vector<2x32xf32>
    %51 = math.tanh %50 : vector<2x32xf32>
    %52 = arith.mulf %47, %51 : vector<2x32xf32>
    %53 = vector.extract_strided_slice %16 {offsets = [1, 0, 0], sizes = [1, 2, 128], strides = [1, 1, 1]} : vector<8x2x128xf32> to vector<1x2x128xf32>
    %54 = vector.shape_cast %53 : vector<1x2x128xf32> to vector<2x128xf32>
    %55 = arith.truncf %52 : vector<2x32xf32> to vector<2x32xbf16>
    %cst_14 = arith.constant dense<0.000000e+00> : vector<2x128xf32>
    %56 = tpu.matmul %55, %3, %cst_14 {dimension_numbers = #tpu.dot_dimension_numbers<[1], [0], [0], [1], [0, 0, 1, 1], [], []>} : vector<2x32xbf16>, vector<32x128xbf16>, vector<2x128xf32> -> vector<2x128xf32>
    %57 = arith.addf %54, %56 : vector<2x128xf32>
    %58 = arith.negf %57 : vector<2x128xf32>
    %59 = math.exp %58 : vector<2x128xf32>
    %cst_15 = arith.constant 1.000000e+00 : f32
    %60 = vector.broadcast %cst_15 : f32 to vector<2x128xf32>
    %61 = arith.addf %60, %59 : vector<2x128xf32>
    %62 = arith.divf %60, %61 : vector<2x128xf32>
    %63 = vector.extract_strided_slice %62 {offsets = [0, 0], sizes = [2, 32], strides = [1, 1]} : vector<2x128xf32> to vector<2x32xf32>
    %64 = vector.extract_strided_slice %62 {offsets = [0, 32], sizes = [2, 32], strides = [1, 1]} : vector<2x128xf32> to vector<2x32xf32>
    %65 = vector.extract_strided_slice %62 {offsets = [0, 64], sizes = [2, 32], strides = [1, 1]} : vector<2x128xf32> to vector<2x32xf32>
    %cst_16 = arith.constant 2.000000e+00 : f32
    %66 = vector.broadcast %cst_16 : f32 to vector<2x32xf32>
    %67 = arith.mulf %66, %65 : vector<2x32xf32>
    %cst_17 = arith.constant 1.000000e+00 : f32
    %68 = vector.broadcast %cst_17 : f32 to vector<2x32xf32>
    %69 = arith.subf %67, %68 : vector<2x32xf32>
    %70 = vector.extract_strided_slice %62 {offsets = [0, 96], sizes = [2, 32], strides = [1, 1]} : vector<2x128xf32> to vector<2x32xf32>
    %71 = arith.mulf %64, %50 : vector<2x32xf32>
    %72 = arith.mulf %63, %69 : vector<2x32xf32>
    %73 = arith.addf %71, %72 : vector<2x32xf32>
    %74 = math.tanh %73 : vector<2x32xf32>
    %75 = arith.mulf %70, %74 : vector<2x32xf32>
    %76 = vector.extract_strided_slice %16 {offsets = [2, 0, 0], sizes = [1, 2, 128], strides = [1, 1, 1]} : vector<8x2x128xf32> to vector<1x2x128xf32>
    %77 = vector.shape_cast %76 : vector<1x2x128xf32> to vector<2x128xf32>
    %78 = arith.truncf %75 : vector<2x32xf32> to vector<2x32xbf16>
    %cst_18 = arith.constant dense<0.000000e+00> : vector<2x128xf32>
    %79 = tpu.matmul %78, %3, %cst_18 {dimension_numbers = #tpu.dot_dimension_numbers<[1], [0], [0], [1], [0, 0, 1, 1], [], []>} : vector<2x32xbf16>, vector<32x128xbf16>, vector<2x128xf32> -> vector<2x128xf32>
    %80 = arith.addf %77, %79 : vector<2x128xf32>
    %81 = arith.negf %80 : vector<2x128xf32>
    %82 = math.exp %81 : vector<2x128xf32>
    %cst_19 = arith.constant 1.000000e+00 : f32
    %83 = vector.broadcast %cst_19 : f32 to vector<2x128xf32>
    %84 = arith.addf %83, %82 : vector<2x128xf32>
    %85 = arith.divf %83, %84 : vector<2x128xf32>
    %86 = vector.extract_strided_slice %85 {offsets = [0, 0], sizes = [2, 32], strides = [1, 1]} : vector<2x128xf32> to vector<2x32xf32>
    %87 = vector.extract_strided_slice %85 {offsets = [0, 32], sizes = [2, 32], strides = [1, 1]} : vector<2x128xf32> to vector<2x32xf32>
    %88 = vector.extract_strided_slice %85 {offsets = [0, 64], sizes = [2, 32], strides = [1, 1]} : vector<2x128xf32> to vector<2x32xf32>
    %cst_20 = arith.constant 2.000000e+00 : f32
    %89 = vector.broadcast %cst_20 : f32 to vector<2x32xf32>
    %90 = arith.mulf %89, %88 : vector<2x32xf32>
    %cst_21 = arith.constant 1.000000e+00 : f32
    %91 = vector.broadcast %cst_21 : f32 to vector<2x32xf32>
    %92 = arith.subf %90, %91 : vector<2x32xf32>
    %93 = vector.extract_strided_slice %85 {offsets = [0, 96], sizes = [2, 32], strides = [1, 1]} : vector<2x128xf32> to vector<2x32xf32>
    %94 = arith.mulf %87, %73 : vector<2x32xf32>
    %95 = arith.mulf %86, %92 : vector<2x32xf32>
    %96 = arith.addf %94, %95 : vector<2x32xf32>
    %97 = math.tanh %96 : vector<2x32xf32>
    %98 = arith.mulf %93, %97 : vector<2x32xf32>
    %99 = vector.extract_strided_slice %16 {offsets = [3, 0, 0], sizes = [1, 2, 128], strides = [1, 1, 1]} : vector<8x2x128xf32> to vector<1x2x128xf32>
    %100 = vector.shape_cast %99 : vector<1x2x128xf32> to vector<2x128xf32>
    %101 = arith.truncf %98 : vector<2x32xf32> to vector<2x32xbf16>
    %cst_22 = arith.constant dense<0.000000e+00> : vector<2x128xf32>
    %102 = tpu.matmul %101, %3, %cst_22 {dimension_numbers = #tpu.dot_dimension_numbers<[1], [0], [0], [1], [0, 0, 1, 1], [], []>} : vector<2x32xbf16>, vector<32x128xbf16>, vector<2x128xf32> -> vector<2x128xf32>
    %103 = arith.addf %100, %102 : vector<2x128xf32>
    %104 = arith.negf %103 : vector<2x128xf32>
    %105 = math.exp %104 : vector<2x128xf32>
    %cst_23 = arith.constant 1.000000e+00 : f32
    %106 = vector.broadcast %cst_23 : f32 to vector<2x128xf32>
    %107 = arith.addf %106, %105 : vector<2x128xf32>
    %108 = arith.divf %106, %107 : vector<2x128xf32>
    %109 = vector.extract_strided_slice %108 {offsets = [0, 0], sizes = [2, 32], strides = [1, 1]} : vector<2x128xf32> to vector<2x32xf32>
    %110 = vector.extract_strided_slice %108 {offsets = [0, 32], sizes = [2, 32], strides = [1, 1]} : vector<2x128xf32> to vector<2x32xf32>
    %111 = vector.extract_strided_slice %108 {offsets = [0, 64], sizes = [2, 32], strides = [1, 1]} : vector<2x128xf32> to vector<2x32xf32>
    %cst_24 = arith.constant 2.000000e+00 : f32
    %112 = vector.broadcast %cst_24 : f32 to vector<2x32xf32>
    %113 = arith.mulf %112, %111 : vector<2x32xf32>
    %cst_25 = arith.constant 1.000000e+00 : f32
    %114 = vector.broadcast %cst_25 : f32 to vector<2x32xf32>
    %115 = arith.subf %113, %114 : vector<2x32xf32>
    %116 = vector.extract_strided_slice %108 {offsets = [0, 96], sizes = [2, 32], strides = [1, 1]} : vector<2x128xf32> to vector<2x32xf32>
    %117 = arith.mulf %110, %96 : vector<2x32xf32>
    %118 = arith.mulf %109, %115 : vector<2x32xf32>
    %119 = arith.addf %117, %118 : vector<2x32xf32>
    %120 = math.tanh %119 : vector<2x32xf32>
    %121 = arith.mulf %116, %120 : vector<2x32xf32>
    %122 = vector.extract_strided_slice %16 {offsets = [4, 0, 0], sizes = [1, 2, 128], strides = [1, 1, 1]} : vector<8x2x128xf32> to vector<1x2x128xf32>
    %123 = vector.shape_cast %122 : vector<1x2x128xf32> to vector<2x128xf32>
    %124 = arith.truncf %121 : vector<2x32xf32> to vector<2x32xbf16>
    %cst_26 = arith.constant dense<0.000000e+00> : vector<2x128xf32>
    %125 = tpu.matmul %124, %3, %cst_26 {dimension_numbers = #tpu.dot_dimension_numbers<[1], [0], [0], [1], [0, 0, 1, 1], [], []>} : vector<2x32xbf16>, vector<32x128xbf16>, vector<2x128xf32> -> vector<2x128xf32>
    %126 = arith.addf %123, %125 : vector<2x128xf32>
    %127 = arith.negf %126 : vector<2x128xf32>
    %128 = math.exp %127 : vector<2x128xf32>
    %cst_27 = arith.constant 1.000000e+00 : f32
    %129 = vector.broadcast %cst_27 : f32 to vector<2x128xf32>
    %130 = arith.addf %129, %128 : vector<2x128xf32>
    %131 = arith.divf %129, %130 : vector<2x128xf32>
    %132 = vector.extract_strided_slice %131 {offsets = [0, 0], sizes = [2, 32], strides = [1, 1]} : vector<2x128xf32> to vector<2x32xf32>
    %133 = vector.extract_strided_slice %131 {offsets = [0, 32], sizes = [2, 32], strides = [1, 1]} : vector<2x128xf32> to vector<2x32xf32>
    %134 = vector.extract_strided_slice %131 {offsets = [0, 64], sizes = [2, 32], strides = [1, 1]} : vector<2x128xf32> to vector<2x32xf32>
    %cst_28 = arith.constant 2.000000e+00 : f32
    %135 = vector.broadcast %cst_28 : f32 to vector<2x32xf32>
    %136 = arith.mulf %135, %134 : vector<2x32xf32>
    %cst_29 = arith.constant 1.000000e+00 : f32
    %137 = vector.broadcast %cst_29 : f32 to vector<2x32xf32>
    %138 = arith.subf %136, %137 : vector<2x32xf32>
    %139 = vector.extract_strided_slice %131 {offsets = [0, 96], sizes = [2, 32], strides = [1, 1]} : vector<2x128xf32> to vector<2x32xf32>
    %140 = arith.mulf %133, %119 : vector<2x32xf32>
    %141 = arith.mulf %132, %138 : vector<2x32xf32>
    %142 = arith.addf %140, %141 : vector<2x32xf32>
    %143 = math.tanh %142 : vector<2x32xf32>
    %144 = arith.mulf %139, %143 : vector<2x32xf32>
    %145 = vector.extract_strided_slice %16 {offsets = [5, 0, 0], sizes = [1, 2, 128], strides = [1, 1, 1]} : vector<8x2x128xf32> to vector<1x2x128xf32>
    %146 = vector.shape_cast %145 : vector<1x2x128xf32> to vector<2x128xf32>
    %147 = arith.truncf %144 : vector<2x32xf32> to vector<2x32xbf16>
    %cst_30 = arith.constant dense<0.000000e+00> : vector<2x128xf32>
    %148 = tpu.matmul %147, %3, %cst_30 {dimension_numbers = #tpu.dot_dimension_numbers<[1], [0], [0], [1], [0, 0, 1, 1], [], []>} : vector<2x32xbf16>, vector<32x128xbf16>, vector<2x128xf32> -> vector<2x128xf32>
    %149 = arith.addf %146, %148 : vector<2x128xf32>
    %150 = arith.negf %149 : vector<2x128xf32>
    %151 = math.exp %150 : vector<2x128xf32>
    %cst_31 = arith.constant 1.000000e+00 : f32
    %152 = vector.broadcast %cst_31 : f32 to vector<2x128xf32>
    %153 = arith.addf %152, %151 : vector<2x128xf32>
    %154 = arith.divf %152, %153 : vector<2x128xf32>
    %155 = vector.extract_strided_slice %154 {offsets = [0, 0], sizes = [2, 32], strides = [1, 1]} : vector<2x128xf32> to vector<2x32xf32>
    %156 = vector.extract_strided_slice %154 {offsets = [0, 32], sizes = [2, 32], strides = [1, 1]} : vector<2x128xf32> to vector<2x32xf32>
    %157 = vector.extract_strided_slice %154 {offsets = [0, 64], sizes = [2, 32], strides = [1, 1]} : vector<2x128xf32> to vector<2x32xf32>
    %cst_32 = arith.constant 2.000000e+00 : f32
    %158 = vector.broadcast %cst_32 : f32 to vector<2x32xf32>
    %159 = arith.mulf %158, %157 : vector<2x32xf32>
    %cst_33 = arith.constant 1.000000e+00 : f32
    %160 = vector.broadcast %cst_33 : f32 to vector<2x32xf32>
    %161 = arith.subf %159, %160 : vector<2x32xf32>
    %162 = vector.extract_strided_slice %154 {offsets = [0, 96], sizes = [2, 32], strides = [1, 1]} : vector<2x128xf32> to vector<2x32xf32>
    %163 = arith.mulf %156, %142 : vector<2x32xf32>
    %164 = arith.mulf %155, %161 : vector<2x32xf32>
    %165 = arith.addf %163, %164 : vector<2x32xf32>
    %166 = math.tanh %165 : vector<2x32xf32>
    %167 = arith.mulf %162, %166 : vector<2x32xf32>
    %168 = vector.extract_strided_slice %16 {offsets = [6, 0, 0], sizes = [1, 2, 128], strides = [1, 1, 1]} : vector<8x2x128xf32> to vector<1x2x128xf32>
    %169 = vector.shape_cast %168 : vector<1x2x128xf32> to vector<2x128xf32>
    %170 = arith.truncf %167 : vector<2x32xf32> to vector<2x32xbf16>
    %cst_34 = arith.constant dense<0.000000e+00> : vector<2x128xf32>
    %171 = tpu.matmul %170, %3, %cst_34 {dimension_numbers = #tpu.dot_dimension_numbers<[1], [0], [0], [1], [0, 0, 1, 1], [], []>} : vector<2x32xbf16>, vector<32x128xbf16>, vector<2x128xf32> -> vector<2x128xf32>
    %172 = arith.addf %169, %171 : vector<2x128xf32>
    %173 = arith.negf %172 : vector<2x128xf32>
    %174 = math.exp %173 : vector<2x128xf32>
    %cst_35 = arith.constant 1.000000e+00 : f32
    %175 = vector.broadcast %cst_35 : f32 to vector<2x128xf32>
    %176 = arith.addf %175, %174 : vector<2x128xf32>
    %177 = arith.divf %175, %176 : vector<2x128xf32>
    %178 = vector.extract_strided_slice %177 {offsets = [0, 0], sizes = [2, 32], strides = [1, 1]} : vector<2x128xf32> to vector<2x32xf32>
    %179 = vector.extract_strided_slice %177 {offsets = [0, 32], sizes = [2, 32], strides = [1, 1]} : vector<2x128xf32> to vector<2x32xf32>
    %180 = vector.extract_strided_slice %177 {offsets = [0, 64], sizes = [2, 32], strides = [1, 1]} : vector<2x128xf32> to vector<2x32xf32>
    %cst_36 = arith.constant 2.000000e+00 : f32
    %181 = vector.broadcast %cst_36 : f32 to vector<2x32xf32>
    %182 = arith.mulf %181, %180 : vector<2x32xf32>
    %cst_37 = arith.constant 1.000000e+00 : f32
    %183 = vector.broadcast %cst_37 : f32 to vector<2x32xf32>
    %184 = arith.subf %182, %183 : vector<2x32xf32>
    %185 = vector.extract_strided_slice %177 {offsets = [0, 96], sizes = [2, 32], strides = [1, 1]} : vector<2x128xf32> to vector<2x32xf32>
    %186 = arith.mulf %179, %165 : vector<2x32xf32>
    %187 = arith.mulf %178, %184 : vector<2x32xf32>
    %188 = arith.addf %186, %187 : vector<2x32xf32>
    %189 = math.tanh %188 : vector<2x32xf32>
    %190 = arith.mulf %185, %189 : vector<2x32xf32>
    %191 = vector.extract_strided_slice %16 {offsets = [7, 0, 0], sizes = [1, 2, 128], strides = [1, 1, 1]} : vector<8x2x128xf32> to vector<1x2x128xf32>
    %192 = vector.shape_cast %191 : vector<1x2x128xf32> to vector<2x128xf32>
    %193 = arith.truncf %190 : vector<2x32xf32> to vector<2x32xbf16>
    %cst_38 = arith.constant dense<0.000000e+00> : vector<2x128xf32>
    %194 = tpu.matmul %193, %3, %cst_38 {dimension_numbers = #tpu.dot_dimension_numbers<[1], [0], [0], [1], [0, 0, 1, 1], [], []>} : vector<2x32xbf16>, vector<32x128xbf16>, vector<2x128xf32> -> vector<2x128xf32>
    %195 = arith.addf %192, %194 : vector<2x128xf32>
    %196 = arith.negf %195 : vector<2x128xf32>
    %197 = math.exp %196 : vector<2x128xf32>
    %cst_39 = arith.constant 1.000000e+00 : f32
    %198 = vector.broadcast %cst_39 : f32 to vector<2x128xf32>
    %199 = arith.addf %198, %197 : vector<2x128xf32>
    %200 = arith.divf %198, %199 : vector<2x128xf32>
    %201 = vector.extract_strided_slice %200 {offsets = [0, 0], sizes = [2, 32], strides = [1, 1]} : vector<2x128xf32> to vector<2x32xf32>
    %202 = vector.extract_strided_slice %200 {offsets = [0, 32], sizes = [2, 32], strides = [1, 1]} : vector<2x128xf32> to vector<2x32xf32>
    %203 = vector.extract_strided_slice %200 {offsets = [0, 64], sizes = [2, 32], strides = [1, 1]} : vector<2x128xf32> to vector<2x32xf32>
    %cst_40 = arith.constant 2.000000e+00 : f32
    %204 = vector.broadcast %cst_40 : f32 to vector<2x32xf32>
    %205 = arith.mulf %204, %203 : vector<2x32xf32>
    %cst_41 = arith.constant 1.000000e+00 : f32
    %206 = vector.broadcast %cst_41 : f32 to vector<2x32xf32>
    %207 = arith.subf %205, %206 : vector<2x32xf32>
    %208 = vector.extract_strided_slice %200 {offsets = [0, 96], sizes = [2, 32], strides = [1, 1]} : vector<2x128xf32> to vector<2x32xf32>
    %209 = arith.mulf %202, %188 : vector<2x32xf32>
    %210 = arith.mulf %201, %207 : vector<2x32xf32>
    %211 = arith.addf %209, %210 : vector<2x32xf32>
    %212 = math.tanh %211 : vector<2x32xf32>
    %213 = arith.mulf %208, %212 : vector<2x32xf32>
    %cst_42 = arith.constant 0.000000e+00 : f32
    %214 = vector.broadcast %cst_42 : f32 to vector<2x32xf32>
    %215 = vector.extract_strided_slice %27 {offsets = [0, 0, 0], sizes = [1, 2, 128], strides = [1, 1, 1]} : vector<8x2x128xf32> to vector<1x2x128xf32>
    %216 = vector.shape_cast %215 : vector<1x2x128xf32> to vector<2x128xf32>
    %217 = arith.truncf %213 : vector<2x32xf32> to vector<2x32xbf16>
    %cst_43 = arith.constant dense<0.000000e+00> : vector<2x128xf32>
    %218 = tpu.matmul %217, %5, %cst_43 {dimension_numbers = #tpu.dot_dimension_numbers<[1], [0], [0], [1], [0, 0, 1, 1], [], []>} : vector<2x32xbf16>, vector<32x128xbf16>, vector<2x128xf32> -> vector<2x128xf32>
    %219 = arith.addf %216, %218 : vector<2x128xf32>
    %220 = arith.negf %219 : vector<2x128xf32>
    %221 = math.exp %220 : vector<2x128xf32>
    %cst_44 = arith.constant 1.000000e+00 : f32
    %222 = vector.broadcast %cst_44 : f32 to vector<2x128xf32>
    %223 = arith.addf %222, %221 : vector<2x128xf32>
    %224 = arith.divf %222, %223 : vector<2x128xf32>
    %225 = vector.extract_strided_slice %224 {offsets = [0, 0], sizes = [2, 32], strides = [1, 1]} : vector<2x128xf32> to vector<2x32xf32>
    %226 = vector.extract_strided_slice %224 {offsets = [0, 32], sizes = [2, 32], strides = [1, 1]} : vector<2x128xf32> to vector<2x32xf32>
    %227 = vector.extract_strided_slice %224 {offsets = [0, 64], sizes = [2, 32], strides = [1, 1]} : vector<2x128xf32> to vector<2x32xf32>
    %cst_45 = arith.constant 2.000000e+00 : f32
    %228 = vector.broadcast %cst_45 : f32 to vector<2x32xf32>
    %229 = arith.mulf %228, %227 : vector<2x32xf32>
    %cst_46 = arith.constant 1.000000e+00 : f32
    %230 = vector.broadcast %cst_46 : f32 to vector<2x32xf32>
    %231 = arith.subf %229, %230 : vector<2x32xf32>
    %232 = vector.extract_strided_slice %224 {offsets = [0, 96], sizes = [2, 32], strides = [1, 1]} : vector<2x128xf32> to vector<2x32xf32>
    %233 = arith.mulf %226, %214 : vector<2x32xf32>
    %234 = arith.mulf %225, %231 : vector<2x32xf32>
    %235 = arith.addf %233, %234 : vector<2x32xf32>
    %236 = math.tanh %235 : vector<2x32xf32>
    %237 = arith.mulf %232, %236 : vector<2x32xf32>
    %238 = vector.extract_strided_slice %27 {offsets = [1, 0, 0], sizes = [1, 2, 128], strides = [1, 1, 1]} : vector<8x2x128xf32> to vector<1x2x128xf32>
    %239 = vector.shape_cast %238 : vector<1x2x128xf32> to vector<2x128xf32>
    %240 = arith.truncf %237 : vector<2x32xf32> to vector<2x32xbf16>
    %cst_47 = arith.constant dense<0.000000e+00> : vector<2x128xf32>
    %241 = tpu.matmul %240, %5, %cst_47 {dimension_numbers = #tpu.dot_dimension_numbers<[1], [0], [0], [1], [0, 0, 1, 1], [], []>} : vector<2x32xbf16>, vector<32x128xbf16>, vector<2x128xf32> -> vector<2x128xf32>
    %242 = arith.addf %239, %241 : vector<2x128xf32>
    %243 = arith.negf %242 : vector<2x128xf32>
    %244 = math.exp %243 : vector<2x128xf32>
    %cst_48 = arith.constant 1.000000e+00 : f32
    %245 = vector.broadcast %cst_48 : f32 to vector<2x128xf32>
    %246 = arith.addf %245, %244 : vector<2x128xf32>
    %247 = arith.divf %245, %246 : vector<2x128xf32>
    %248 = vector.extract_strided_slice %247 {offsets = [0, 0], sizes = [2, 32], strides = [1, 1]} : vector<2x128xf32> to vector<2x32xf32>
    %249 = vector.extract_strided_slice %247 {offsets = [0, 32], sizes = [2, 32], strides = [1, 1]} : vector<2x128xf32> to vector<2x32xf32>
    %250 = vector.extract_strided_slice %247 {offsets = [0, 64], sizes = [2, 32], strides = [1, 1]} : vector<2x128xf32> to vector<2x32xf32>
    %cst_49 = arith.constant 2.000000e+00 : f32
    %251 = vector.broadcast %cst_49 : f32 to vector<2x32xf32>
    %252 = arith.mulf %251, %250 : vector<2x32xf32>
    %cst_50 = arith.constant 1.000000e+00 : f32
    %253 = vector.broadcast %cst_50 : f32 to vector<2x32xf32>
    %254 = arith.subf %252, %253 : vector<2x32xf32>
    %255 = vector.extract_strided_slice %247 {offsets = [0, 96], sizes = [2, 32], strides = [1, 1]} : vector<2x128xf32> to vector<2x32xf32>
    %256 = arith.mulf %249, %235 : vector<2x32xf32>
    %257 = arith.mulf %248, %254 : vector<2x32xf32>
    %258 = arith.addf %256, %257 : vector<2x32xf32>
    %259 = math.tanh %258 : vector<2x32xf32>
    %260 = arith.mulf %255, %259 : vector<2x32xf32>
    %261 = vector.extract_strided_slice %27 {offsets = [2, 0, 0], sizes = [1, 2, 128], strides = [1, 1, 1]} : vector<8x2x128xf32> to vector<1x2x128xf32>
    %262 = vector.shape_cast %261 : vector<1x2x128xf32> to vector<2x128xf32>
    %263 = arith.truncf %260 : vector<2x32xf32> to vector<2x32xbf16>
    %cst_51 = arith.constant dense<0.000000e+00> : vector<2x128xf32>
    %264 = tpu.matmul %263, %5, %cst_51 {dimension_numbers = #tpu.dot_dimension_numbers<[1], [0], [0], [1], [0, 0, 1, 1], [], []>} : vector<2x32xbf16>, vector<32x128xbf16>, vector<2x128xf32> -> vector<2x128xf32>
    %265 = arith.addf %262, %264 : vector<2x128xf32>
    %266 = arith.negf %265 : vector<2x128xf32>
    %267 = math.exp %266 : vector<2x128xf32>
    %cst_52 = arith.constant 1.000000e+00 : f32
    %268 = vector.broadcast %cst_52 : f32 to vector<2x128xf32>
    %269 = arith.addf %268, %267 : vector<2x128xf32>
    %270 = arith.divf %268, %269 : vector<2x128xf32>
    %271 = vector.extract_strided_slice %270 {offsets = [0, 0], sizes = [2, 32], strides = [1, 1]} : vector<2x128xf32> to vector<2x32xf32>
    %272 = vector.extract_strided_slice %270 {offsets = [0, 32], sizes = [2, 32], strides = [1, 1]} : vector<2x128xf32> to vector<2x32xf32>
    %273 = vector.extract_strided_slice %270 {offsets = [0, 64], sizes = [2, 32], strides = [1, 1]} : vector<2x128xf32> to vector<2x32xf32>
    %cst_53 = arith.constant 2.000000e+00 : f32
    %274 = vector.broadcast %cst_53 : f32 to vector<2x32xf32>
    %275 = arith.mulf %274, %273 : vector<2x32xf32>
    %cst_54 = arith.constant 1.000000e+00 : f32
    %276 = vector.broadcast %cst_54 : f32 to vector<2x32xf32>
    %277 = arith.subf %275, %276 : vector<2x32xf32>
    %278 = vector.extract_strided_slice %270 {offsets = [0, 96], sizes = [2, 32], strides = [1, 1]} : vector<2x128xf32> to vector<2x32xf32>
    %279 = arith.mulf %272, %258 : vector<2x32xf32>
    %280 = arith.mulf %271, %277 : vector<2x32xf32>
    %281 = arith.addf %279, %280 : vector<2x32xf32>
    %282 = math.tanh %281 : vector<2x32xf32>
    %283 = arith.mulf %278, %282 : vector<2x32xf32>
    %284 = vector.extract_strided_slice %27 {offsets = [3, 0, 0], sizes = [1, 2, 128], strides = [1, 1, 1]} : vector<8x2x128xf32> to vector<1x2x128xf32>
    %285 = vector.shape_cast %284 : vector<1x2x128xf32> to vector<2x128xf32>
    %286 = arith.truncf %283 : vector<2x32xf32> to vector<2x32xbf16>
    %cst_55 = arith.constant dense<0.000000e+00> : vector<2x128xf32>
    %287 = tpu.matmul %286, %5, %cst_55 {dimension_numbers = #tpu.dot_dimension_numbers<[1], [0], [0], [1], [0, 0, 1, 1], [], []>} : vector<2x32xbf16>, vector<32x128xbf16>, vector<2x128xf32> -> vector<2x128xf32>
    %288 = arith.addf %285, %287 : vector<2x128xf32>
    %289 = arith.negf %288 : vector<2x128xf32>
    %290 = math.exp %289 : vector<2x128xf32>
    %cst_56 = arith.constant 1.000000e+00 : f32
    %291 = vector.broadcast %cst_56 : f32 to vector<2x128xf32>
    %292 = arith.addf %291, %290 : vector<2x128xf32>
    %293 = arith.divf %291, %292 : vector<2x128xf32>
    %294 = vector.extract_strided_slice %293 {offsets = [0, 0], sizes = [2, 32], strides = [1, 1]} : vector<2x128xf32> to vector<2x32xf32>
    %295 = vector.extract_strided_slice %293 {offsets = [0, 32], sizes = [2, 32], strides = [1, 1]} : vector<2x128xf32> to vector<2x32xf32>
    %296 = vector.extract_strided_slice %293 {offsets = [0, 64], sizes = [2, 32], strides = [1, 1]} : vector<2x128xf32> to vector<2x32xf32>
    %cst_57 = arith.constant 2.000000e+00 : f32
    %297 = vector.broadcast %cst_57 : f32 to vector<2x32xf32>
    %298 = arith.mulf %297, %296 : vector<2x32xf32>
    %cst_58 = arith.constant 1.000000e+00 : f32
    %299 = vector.broadcast %cst_58 : f32 to vector<2x32xf32>
    %300 = arith.subf %298, %299 : vector<2x32xf32>
    %301 = vector.extract_strided_slice %293 {offsets = [0, 96], sizes = [2, 32], strides = [1, 1]} : vector<2x128xf32> to vector<2x32xf32>
    %302 = arith.mulf %295, %281 : vector<2x32xf32>
    %303 = arith.mulf %294, %300 : vector<2x32xf32>
    %304 = arith.addf %302, %303 : vector<2x32xf32>
    %305 = math.tanh %304 : vector<2x32xf32>
    %306 = arith.mulf %301, %305 : vector<2x32xf32>
    %307 = vector.extract_strided_slice %27 {offsets = [4, 0, 0], sizes = [1, 2, 128], strides = [1, 1, 1]} : vector<8x2x128xf32> to vector<1x2x128xf32>
    %308 = vector.shape_cast %307 : vector<1x2x128xf32> to vector<2x128xf32>
    %309 = arith.truncf %306 : vector<2x32xf32> to vector<2x32xbf16>
    %cst_59 = arith.constant dense<0.000000e+00> : vector<2x128xf32>
    %310 = tpu.matmul %309, %5, %cst_59 {dimension_numbers = #tpu.dot_dimension_numbers<[1], [0], [0], [1], [0, 0, 1, 1], [], []>} : vector<2x32xbf16>, vector<32x128xbf16>, vector<2x128xf32> -> vector<2x128xf32>
    %311 = arith.addf %308, %310 : vector<2x128xf32>
    %312 = arith.negf %311 : vector<2x128xf32>
    %313 = math.exp %312 : vector<2x128xf32>
    %cst_60 = arith.constant 1.000000e+00 : f32
    %314 = vector.broadcast %cst_60 : f32 to vector<2x128xf32>
    %315 = arith.addf %314, %313 : vector<2x128xf32>
    %316 = arith.divf %314, %315 : vector<2x128xf32>
    %317 = vector.extract_strided_slice %316 {offsets = [0, 0], sizes = [2, 32], strides = [1, 1]} : vector<2x128xf32> to vector<2x32xf32>
    %318 = vector.extract_strided_slice %316 {offsets = [0, 32], sizes = [2, 32], strides = [1, 1]} : vector<2x128xf32> to vector<2x32xf32>
    %319 = vector.extract_strided_slice %316 {offsets = [0, 64], sizes = [2, 32], strides = [1, 1]} : vector<2x128xf32> to vector<2x32xf32>
    %cst_61 = arith.constant 2.000000e+00 : f32
    %320 = vector.broadcast %cst_61 : f32 to vector<2x32xf32>
    %321 = arith.mulf %320, %319 : vector<2x32xf32>
    %cst_62 = arith.constant 1.000000e+00 : f32
    %322 = vector.broadcast %cst_62 : f32 to vector<2x32xf32>
    %323 = arith.subf %321, %322 : vector<2x32xf32>
    %324 = vector.extract_strided_slice %316 {offsets = [0, 96], sizes = [2, 32], strides = [1, 1]} : vector<2x128xf32> to vector<2x32xf32>
    %325 = arith.mulf %318, %304 : vector<2x32xf32>
    %326 = arith.mulf %317, %323 : vector<2x32xf32>
    %327 = arith.addf %325, %326 : vector<2x32xf32>
    %328 = math.tanh %327 : vector<2x32xf32>
    %329 = arith.mulf %324, %328 : vector<2x32xf32>
    %330 = vector.extract_strided_slice %27 {offsets = [5, 0, 0], sizes = [1, 2, 128], strides = [1, 1, 1]} : vector<8x2x128xf32> to vector<1x2x128xf32>
    %331 = vector.shape_cast %330 : vector<1x2x128xf32> to vector<2x128xf32>
    %332 = arith.truncf %329 : vector<2x32xf32> to vector<2x32xbf16>
    %cst_63 = arith.constant dense<0.000000e+00> : vector<2x128xf32>
    %333 = tpu.matmul %332, %5, %cst_63 {dimension_numbers = #tpu.dot_dimension_numbers<[1], [0], [0], [1], [0, 0, 1, 1], [], []>} : vector<2x32xbf16>, vector<32x128xbf16>, vector<2x128xf32> -> vector<2x128xf32>
    %334 = arith.addf %331, %333 : vector<2x128xf32>
    %335 = arith.negf %334 : vector<2x128xf32>
    %336 = math.exp %335 : vector<2x128xf32>
    %cst_64 = arith.constant 1.000000e+00 : f32
    %337 = vector.broadcast %cst_64 : f32 to vector<2x128xf32>
    %338 = arith.addf %337, %336 : vector<2x128xf32>
    %339 = arith.divf %337, %338 : vector<2x128xf32>
    %340 = vector.extract_strided_slice %339 {offsets = [0, 0], sizes = [2, 32], strides = [1, 1]} : vector<2x128xf32> to vector<2x32xf32>
    %341 = vector.extract_strided_slice %339 {offsets = [0, 32], sizes = [2, 32], strides = [1, 1]} : vector<2x128xf32> to vector<2x32xf32>
    %342 = vector.extract_strided_slice %339 {offsets = [0, 64], sizes = [2, 32], strides = [1, 1]} : vector<2x128xf32> to vector<2x32xf32>
    %cst_65 = arith.constant 2.000000e+00 : f32
    %343 = vector.broadcast %cst_65 : f32 to vector<2x32xf32>
    %344 = arith.mulf %343, %342 : vector<2x32xf32>
    %cst_66 = arith.constant 1.000000e+00 : f32
    %345 = vector.broadcast %cst_66 : f32 to vector<2x32xf32>
    %346 = arith.subf %344, %345 : vector<2x32xf32>
    %347 = vector.extract_strided_slice %339 {offsets = [0, 96], sizes = [2, 32], strides = [1, 1]} : vector<2x128xf32> to vector<2x32xf32>
    %348 = arith.mulf %341, %327 : vector<2x32xf32>
    %349 = arith.mulf %340, %346 : vector<2x32xf32>
    %350 = arith.addf %348, %349 : vector<2x32xf32>
    %351 = math.tanh %350 : vector<2x32xf32>
    %352 = arith.mulf %347, %351 : vector<2x32xf32>
    %353 = vector.extract_strided_slice %27 {offsets = [6, 0, 0], sizes = [1, 2, 128], strides = [1, 1, 1]} : vector<8x2x128xf32> to vector<1x2x128xf32>
    %354 = vector.shape_cast %353 : vector<1x2x128xf32> to vector<2x128xf32>
    %355 = arith.truncf %352 : vector<2x32xf32> to vector<2x32xbf16>
    %cst_67 = arith.constant dense<0.000000e+00> : vector<2x128xf32>
    %356 = tpu.matmul %355, %5, %cst_67 {dimension_numbers = #tpu.dot_dimension_numbers<[1], [0], [0], [1], [0, 0, 1, 1], [], []>} : vector<2x32xbf16>, vector<32x128xbf16>, vector<2x128xf32> -> vector<2x128xf32>
    %357 = arith.addf %354, %356 : vector<2x128xf32>
    %358 = arith.negf %357 : vector<2x128xf32>
    %359 = math.exp %358 : vector<2x128xf32>
    %cst_68 = arith.constant 1.000000e+00 : f32
    %360 = vector.broadcast %cst_68 : f32 to vector<2x128xf32>
    %361 = arith.addf %360, %359 : vector<2x128xf32>
    %362 = arith.divf %360, %361 : vector<2x128xf32>
    %363 = vector.extract_strided_slice %362 {offsets = [0, 0], sizes = [2, 32], strides = [1, 1]} : vector<2x128xf32> to vector<2x32xf32>
    %364 = vector.extract_strided_slice %362 {offsets = [0, 32], sizes = [2, 32], strides = [1, 1]} : vector<2x128xf32> to vector<2x32xf32>
    %365 = vector.extract_strided_slice %362 {offsets = [0, 64], sizes = [2, 32], strides = [1, 1]} : vector<2x128xf32> to vector<2x32xf32>
    %cst_69 = arith.constant 2.000000e+00 : f32
    %366 = vector.broadcast %cst_69 : f32 to vector<2x32xf32>
    %367 = arith.mulf %366, %365 : vector<2x32xf32>
    %cst_70 = arith.constant 1.000000e+00 : f32
    %368 = vector.broadcast %cst_70 : f32 to vector<2x32xf32>
    %369 = arith.subf %367, %368 : vector<2x32xf32>
    %370 = vector.extract_strided_slice %362 {offsets = [0, 96], sizes = [2, 32], strides = [1, 1]} : vector<2x128xf32> to vector<2x32xf32>
    %371 = arith.mulf %364, %350 : vector<2x32xf32>
    %372 = arith.mulf %363, %369 : vector<2x32xf32>
    %373 = arith.addf %371, %372 : vector<2x32xf32>
    %374 = math.tanh %373 : vector<2x32xf32>
    %375 = arith.mulf %370, %374 : vector<2x32xf32>
    %376 = vector.extract_strided_slice %27 {offsets = [7, 0, 0], sizes = [1, 2, 128], strides = [1, 1, 1]} : vector<8x2x128xf32> to vector<1x2x128xf32>
    %377 = vector.shape_cast %376 : vector<1x2x128xf32> to vector<2x128xf32>
    %378 = arith.truncf %375 : vector<2x32xf32> to vector<2x32xbf16>
    %cst_71 = arith.constant dense<0.000000e+00> : vector<2x128xf32>
    %379 = tpu.matmul %378, %5, %cst_71 {dimension_numbers = #tpu.dot_dimension_numbers<[1], [0], [0], [1], [0, 0, 1, 1], [], []>} : vector<2x32xbf16>, vector<32x128xbf16>, vector<2x128xf32> -> vector<2x128xf32>
    %380 = arith.addf %377, %379 : vector<2x128xf32>
    %381 = arith.negf %380 : vector<2x128xf32>
    %382 = math.exp %381 : vector<2x128xf32>
    %cst_72 = arith.constant 1.000000e+00 : f32
    %383 = vector.broadcast %cst_72 : f32 to vector<2x128xf32>
    %384 = arith.addf %383, %382 : vector<2x128xf32>
    %385 = arith.divf %383, %384 : vector<2x128xf32>
    %386 = vector.extract_strided_slice %385 {offsets = [0, 0], sizes = [2, 32], strides = [1, 1]} : vector<2x128xf32> to vector<2x32xf32>
    %387 = vector.extract_strided_slice %385 {offsets = [0, 32], sizes = [2, 32], strides = [1, 1]} : vector<2x128xf32> to vector<2x32xf32>
    %388 = vector.extract_strided_slice %385 {offsets = [0, 64], sizes = [2, 32], strides = [1, 1]} : vector<2x128xf32> to vector<2x32xf32>
    %cst_73 = arith.constant 2.000000e+00 : f32
    %389 = vector.broadcast %cst_73 : f32 to vector<2x32xf32>
    %390 = arith.mulf %389, %388 : vector<2x32xf32>
    %cst_74 = arith.constant 1.000000e+00 : f32
    %391 = vector.broadcast %cst_74 : f32 to vector<2x32xf32>
    %392 = arith.subf %390, %391 : vector<2x32xf32>
    %393 = vector.extract_strided_slice %385 {offsets = [0, 96], sizes = [2, 32], strides = [1, 1]} : vector<2x128xf32> to vector<2x32xf32>
    %394 = arith.mulf %387, %373 : vector<2x32xf32>
    %395 = arith.mulf %386, %392 : vector<2x32xf32>
    %396 = arith.addf %394, %395 : vector<2x32xf32>
    %397 = math.tanh %396 : vector<2x32xf32>
    %398 = arith.mulf %393, %397 : vector<2x32xf32>
    %399 = vector.shape_cast %237 : vector<2x32xf32> to vector<1x2x32xf32>
    %400 = vector.shape_cast %260 : vector<2x32xf32> to vector<1x2x32xf32>
    %401 = vector.shape_cast %283 : vector<2x32xf32> to vector<1x2x32xf32>
    %402 = vector.shape_cast %306 : vector<2x32xf32> to vector<1x2x32xf32>
    %403 = vector.shape_cast %329 : vector<2x32xf32> to vector<1x2x32xf32>
    %404 = vector.shape_cast %352 : vector<2x32xf32> to vector<1x2x32xf32>
    %405 = vector.shape_cast %375 : vector<2x32xf32> to vector<1x2x32xf32>
    %406 = vector.shape_cast %398 : vector<2x32xf32> to vector<1x2x32xf32>
    %407 = tpu.concatenate %399, %400, %401, %402, %403, %404, %405, %406 in 0 : vector<1x2x32xf32>, vector<1x2x32xf32>, vector<1x2x32xf32>, vector<1x2x32xf32>, vector<1x2x32xf32>, vector<1x2x32xf32>, vector<1x2x32xf32>, vector<1x2x32xf32> -> vector<8x2x32xf32>
    %408 = vector.extract_strided_slice %1 {offsets = [4, 0], sizes = [1, 32], strides = [1, 1]} : vector<8x128xf32> to vector<1x32xf32>
    %409 = vector.shape_cast %408 : vector<1x32xf32> to vector<32xf32>
    %410 = vector.extract_strided_slice %1 {offsets = [5, 0], sizes = [1, 1], strides = [1, 1]} : vector<8x128xf32> to vector<1x1xf32>
    %411 = vector.shape_cast %409 : vector<32xf32> to vector<1x1x32xf32>
    %412 = vector.broadcast %411 : vector<1x1x32xf32> to vector<8x2x32xf32>
    %413 = arith.mulf %407, %412 : vector<8x2x32xf32>
    %cst_75 = arith.constant dense<0.000000e+00> : vector<8x2xf32>
    %414 = vector.multi_reduction <add>, %413, %cst_75 [2] : vector<8x2x32xf32> to vector<8x2xf32>
    %415 = vector.broadcast %410 : vector<1x1xf32> to vector<8x2xf32>
    %416 = arith.addf %414, %415 : vector<8x2xf32>
    %c0_76 = arith.constant 0 : index
    %c0_77 = arith.constant 0 : index
    %417 = vector.load %arg3[%c0_76, %c0_77] : memref<8x2xf32, #tpu.memory_space<vmem>>, vector<8x2xf32>
    tpu.vector_store %arg3[%c0_76, %c0_77], %416 {strides = array<i32>} : memref<8x2xf32, #tpu.memory_space<vmem>>, vector<8x2xf32>,
    return
  }
}

</mosaic_0001>

<llo_original>
// kernel: encoder_decoder_fc_forward.1
$region0: #{encoder_decoder_fc_forward.1}
  #allocation0 [shape = 'u32[]', space=smem, size = 0x4, offset = 0x4, fixed_abs, tag = 'smem constant byte address 0x4 - core index']
  #allocation1 [shape = 'u32[72,128]{1,0:T(1,128)}', space=vmem, size = 0x9000, scoped, tag = 'internal scratch']
  %s0 = inlined_call_operand.vmem [shape: f32[8,2,1], index: 0, kind: input, shape index: {}]
  %s1 = inlined_call_operand.vmem [shape: bf16[2,32,128], index: 1, kind: input, shape index: {}]
  %s2 = inlined_call_operand.vmem [shape: f32[8,128], index: 2, kind: input, shape index: {}]
  %s3 = inlined_call_operand.vmem [shape: f32[8,2], index: 3, kind: output, shape index: {}]
  %s4 = sld [smem:[#allocation0]]
  $region22: #{encoder_decoder_fc_forward.1} parent=0
    _
  %s6 = ssub.s32 1, %s4
  %s7 = scalar_select 0, %s6, %s4
  // Predicated region
  $region2: #{encoder_decoder_fc_forward.1} parent=0 // pred_check
    _
  $region3: #{encoder_decoder_fc_forward.1} parent=0 // pred_check_branch
    %9 = sbr.rel (0) target = $region5
  $region4: #{encoder_decoder_fc_forward.1} parent=0 // pred_region
    _
  $region5: #{encoder_decoder_fc_forward.1} parent=0 // pred_fallthru
    _
  // Predicated region
  $region6: #{encoder_decoder_fc_forward.1} parent=0 // pred_check
    _
  $region7: #{encoder_decoder_fc_forward.1} parent=0 // pred_check_branch
    %11 = sbr.rel (0) target = $region9
  $region8: #{encoder_decoder_fc_forward.1} parent=0 // pred_region
    _
  $region9: #{encoder_decoder_fc_forward.1} parent=0 // pred_fallthru
    _
  // Predicated region
  $region10: #{encoder_decoder_fc_forward.1} parent=0 // pred_check
    _
  $region11: #{encoder_decoder_fc_forward.1} parent=0 // pred_check_branch
    %13 = sbr.rel (0) target = $region13
  $region12: #{encoder_decoder_fc_forward.1} parent=0 // pred_region
    _
  $region13: #{encoder_decoder_fc_forward.1} parent=0 // pred_fallthru
    _
  %v15 = vld [vmem:[%s0] sm:$0x3]
  %v16 = vld [vmem:[%s0 + $0x2] sm:$0x3]
  %v17 = vld [vmem:[%s0 + $0x4] sm:$0x3]
  %v18 = vld [vmem:[%s0 + $0x6] sm:$0x3]
  %v19 = vld [vmem:[%s0 + $0x8] sm:$0x3]
  %v20 = vld [vmem:[%s0 + $0xa] sm:$0x3]
  %v21 = vld [vmem:[%s0 + $0xc] sm:$0x3]
  %v22 = vld [vmem:[%s0 + $0xe] sm:$0x3]
  %v23 = vld [vmem:[%s2] sm:$0xff]
  %v24 = vld [vmem:[%s1] sm:$0xf]
  %v25 = vld [vmem:[%s1 + $0x4] sm:$0xf]
  %v26 = vld [vmem:[%s1 + $0x8] sm:$0xf]
  %v27 = vld [vmem:[%s1 + $0xc] sm:$0xf]
  %s28 = scalar_lea.vmem %s1, 16
  %v29 = vld [vmem:[%s28] sm:$0xf]
  %v30 = vld [vmem:[%s28 + $0x4] sm:$0xf]
  %v31 = vld [vmem:[%s28 + $0x8] sm:$0xf]
  %v32 = vld [vmem:[%s28 + $0xc] sm:$0xf]
  %34 = vset.pattern.permute.xlu0 0
  %35 = vperm.xlu0 %34, %v15
  %v36 = vpop.permute.xlu0 %35
  %39 = vset.pattern.permute.xlu0 0
  %40 = vperm.xlu0 %39, %v16
  %v41 = vpop.permute.xlu0 %40
  %44 = vset.pattern.permute.xlu0 0
  %45 = vperm.xlu0 %44, %v17
  %v46 = vpop.permute.xlu0 %45
  %49 = vset.pattern.permute.xlu0 0
  %50 = vperm.xlu0 %49, %v18
  %v51 = vpop.permute.xlu0 %50
  %54 = vset.pattern.permute.xlu0 0
  %55 = vperm.xlu0 %54, %v19
  %v56 = vpop.permute.xlu0 %55
  %59 = vset.pattern.permute.xlu0 0
  %60 = vperm.xlu0 %59, %v20
  %v61 = vpop.permute.xlu0 %60
  %64 = vset.pattern.permute.xlu0 0
  %65 = vperm.xlu0 %64, %v21
  %v66 = vpop.permute.xlu0 %65
  %69 = vset.pattern.permute.xlu0 0
  %70 = vperm.xlu0 %69, %v22
  %v71 = vpop.permute.xlu0 %70
  %v73 = vperm.slane %v23, 0
  %v74 = vmul.f32 %v36, %v73
  %v75 = vmul.f32 %v41, %v73
  %v76 = vmul.f32 %v46, %v73
  %v77 = vmul.f32 %v51, %v73
  %v78 = vmul.f32 %v56, %v73
  %v79 = vmul.f32 %v61, %v73
  %v80 = vmul.f32 %v66, %v73
  %v81 = vmul.f32 %v71, %v73
  %v82 = vperm.slane %v23, 1
  %v83 = vadd.f32 %v74, %v82
  %v84 = vadd.f32 %v75, %v82
  %v85 = vadd.f32 %v76, %v82
  %v86 = vadd.f32 %v77, %v82
  %v87 = vadd.f32 %v78, %v82
  %v88 = vadd.f32 %v79, %v82
  %v89 = vadd.f32 %v80, %v82
  %v90 = vadd.f32 %v81, %v82
  %v91 = vperm.slane %v23, 2
  %v92 = vmul.f32 %v36, %v91
  %v93 = vmul.f32 %v41, %v91
  %v94 = vmul.f32 %v46, %v91
  %v95 = vmul.f32 %v51, %v91
  %v96 = vmul.f32 %v56, %v91
  %v97 = vmul.f32 %v61, %v91
  %v98 = vmul.f32 %v66, %v91
  %v99 = vmul.f32 %v71, %v91
  %v100 = vperm.slane %v23, 3
  %v101 = vadd.f32 %v92, %v100
  %v102 = vadd.f32 %v93, %v100
  %v103 = vadd.f32 %v94, %v100
  %v104 = vadd.f32 %v95, %v100
  %v105 = vadd.f32 %v96, %v100
  %v106 = vadd.f32 %v97, %v100
  %v107 = vadd.f32 %v98, %v100
  %v108 = vadd.f32 %v99, %v100
  %v113 = vunpack.c.l.b16 %v24
  %v114 = vunpack.c.l.b16 %v25
  %v115 = vunpack.c.l.b16 %v26
  %v116 = vunpack.c.l.b16 %v27
  %v117 = vpack.c.b16 %v114, %v113
  %v118 = vpack.c.b16 %v116, %v115
  %vm121 = vcmask 261120
  %v123 = vsel %vm121, 0, 0
  %125 = vmatpush.bf16.msra.mxu0 0
  %126 = vmatpush.bf16.msra.mxu0 0
  %127 = vmatpush.bf16.msra.mxu0 0
  %128 = vmatpush.bf16.msra.mxu0 0
  %129 = vmatpush.bf16.msra.mxu0 0
  %130 = vmatpush.bf16.msra.mxu0 0
  %131 = vmatpush.bf16.msra.mxu0 %v118
  %132 = vmatpush.bf16.msra.mxu0 %v117
  %133 = vmatmul.bf16.gmra.mxu0 %v123
  %v134 = vpop.f32.mrf.mxu0
  %v135 = vadd.f32 0.0, %v134
  %v136 = vpop.f32.mrf.mxu0
  %137 = vdwg.mxu0
  %v138 = vadd.f32 %v83, %v135
  %v139 = vxor.u32 %v138, 2147483648
  %v140 = vmul.f32 %v139, 1.442695
  %v141 = vpow.pop %v140
  %v142 = vadd.f32 %v141, 1.0
  %v143 = vrcp.pop %v142
  %v144 = vmul.f32 %v142, %v143
  %v145 = vsub.f32 1.0, %v144
  %v146 = vmul.f32 %v143, %v145
  %v147 = vadd.f32 %v143, %v146
  %vm148 = vweird.f32 %v142
  %vm149 = vweird.f32 %v143
  %vm150 = vmor %vm148, %vm149
  %v151 = vsel %vm150, %v143, %v147
  %v152 = vand.u32 2147483647, %v142
  %vm153 = vcmp.eq.f32.partialorder %v152, 8.507059e+37
  %v154 = vand.u32 %v142, 2147483648
  %v155 = vor.u32 1.1754944e-38, %v154
  %v156 = vsel %vm153, %v155, %v151
  %v157 = vmul.f32 1.0, %v156
  %v158 = vmul.f32 %v157, 2.0
  %v159 = vsub.f32 %v158, 1.0
  %v160 = vmul.f32 %v157, 0.0
  %162 = vrot.lane.b32.xlu0 %v159, 64
  %v163 = vpop.permute.xlu0 %162
  %v165 = vmul.f32 %v157, %v163
  %167 = vrot.lane.b32.xlu0 %v165, 32
  %v168 = vpop.permute.xlu0 %167
  %v170 = vadd.f32 %v160, %v168
  %v171 = vtanh.pop %v170
  %173 = vrot.lane.b32.xlu0 %v171, 64
  %v174 = vpop.permute.xlu0 %173
  %v176 = vmul.f32 %v157, %v174
  %v177 = vpack.c.bf16 %v176, %v176
  %179 = vrot.lane.b32.xlu0 %v177, 32
  %v180 = vpop.permute.xlu0 %179
  %v182 = vsel %vm121, %v180, 0
  %184 = vmatpush.bf16.msra.mxu0 0
  %185 = vmatpush.bf16.msra.mxu0 0
  %186 = vmatpush.bf16.msra.mxu0 0
  %187 = vmatpush.bf16.msra.mxu0 0
  %188 = vmatpush.bf16.msra.mxu0 0
  %189 = vmatpush.bf16.msra.mxu0 0
  %190 = vmatpush.bf16.msra.mxu0 %v118
  %191 = vmatpush.bf16.msra.mxu0 %v117
  %192 = vmatmul.bf16.gmra.mxu0 %v182
  %v193 = vpop.f32.mrf.mxu0
  %v194 = vadd.f32 0.0, %v193
  %v195 = vpop.f32.mrf.mxu0
  %196 = vdwg.mxu0
  %v197 = vadd.f32 %v84, %v194
  %v198 = vxor.u32 %v197, 2147483648
  %v199 = vmul.f32 %v198, 1.442695
  %v200 = vpow.pop %v199
  %v201 = vadd.f32 %v200, 1.0
  %v202 = vrcp.pop %v201
  %v203 = vmul.f32 %v201, %v202
  %v204 = vsub.f32 1.0, %v203
  %v205 = vmul.f32 %v202, %v204
  %v206 = vadd.f32 %v202, %v205
  %vm207 = vweird.f32 %v201
  %vm208 = vweird.f32 %v202
  %vm209 = vmor %vm207, %vm208
  %v210 = vsel %vm209, %v202, %v206
  %v211 = vand.u32 2147483647, %v201
  %vm212 = vcmp.eq.f32.partialorder %v211, 8.507059e+37
  %v213 = vand.u32 %v201, 2147483648
  %v214 = vor.u32 1.1754944e-38, %v213
  %v215 = vsel %vm212, %v214, %v210
  %v216 = vmul.f32 1.0, %v215
  %v217 = vmul.f32 %v216, 2.0
  %v218 = vsub.f32 %v217, 1.0
  %v219 = vmul.f32 %v216, %v170
  %221 = vrot.lane.b32.xlu0 %v218, 64
  %v222 = vpop.permute.xlu0 %221
  %v224 = vmul.f32 %v216, %v222
  %226 = vrot.lane.b32.xlu0 %v224, 32
  %v227 = vpop.permute.xlu0 %226
  %v229 = vadd.f32 %v219, %v227
  %v230 = vtanh.pop %v229
  %232 = vrot.lane.b32.xlu0 %v230, 64
  %v233 = vpop.permute.xlu0 %232
  %v235 = vmul.f32 %v216, %v233
  %v236 = vpack.c.bf16 %v235, %v235
  %238 = vrot.lane.b32.xlu0 %v236, 32
  %v239 = vpop.permute.xlu0 %238
  %v241 = vsel %vm121, %v239, 0
  %243 = vmatpush.bf16.msra.mxu0 0
  %244 = vmatpush.bf16.msra.mxu0 0
  %245 = vmatpush.bf16.msra.mxu0 0
  %246 = vmatpush.bf16.msra.mxu0 0
  %247 = vmatpush.bf16.msra.mxu0 0
  %248 = vmatpush.bf16.msra.mxu0 0
  %249 = vmatpush.bf16.msra.mxu0 %v118
  %250 = vmatpush.bf16.msra.mxu0 %v117
  %251 = vmatmul.bf16.gmra.mxu0 %v241
  %v252 = vpop.f32.mrf.mxu0
  %v253 = vadd.f32 0.0, %v252
  %v254 = vpop.f32.mrf.mxu0
  %255 = vdwg.mxu0
  %v256 = vadd.f32 %v85, %v253
  %v257 = vxor.u32 %v256, 2147483648
  %v258 = vmul.f32 %v257, 1.442695
  %v259 = vpow.pop %v258
  %v260 = vadd.f32 %v259, 1.0
  %v261 = vrcp.pop %v260
  %v262 = vmul.f32 %v260, %v261
  %v263 = vsub.f32 1.0, %v262
  %v264 = vmul.f32 %v261, %v263
  %v265 = vadd.f32 %v261, %v264
  %vm266 = vweird.f32 %v260
  %vm267 = vweird.f32 %v261
  %vm268 = vmor %vm266, %vm267
  %v269 = vsel %vm268, %v261, %v265
  %v270 = vand.u32 2147483647, %v260
  %vm271 = vcmp.eq.f32.partialorder %v270, 8.507059e+37
  %v272 = vand.u32 %v260, 2147483648
  %v273 = vor.u32 1.1754944e-38, %v272
  %v274 = vsel %vm271, %v273, %v269
  %v275 = vmul.f32 1.0, %v274
  %v276 = vmul.f32 %v275, 2.0
  %v277 = vsub.f32 %v276, 1.0
  %v278 = vmul.f32 %v275, %v229
  %280 = vrot.lane.b32.xlu0 %v277, 64
  %v281 = vpop.permute.xlu0 %280
  %v283 = vmul.f32 %v275, %v281
  %285 = vrot.lane.b32.xlu0 %v283, 32
  %v286 = vpop.permute.xlu0 %285
  %v288 = vadd.f32 %v278, %v286
  %v289 = vtanh.pop %v288
  %291 = vrot.lane.b32.xlu0 %v289, 64
  %v292 = vpop.permute.xlu0 %291
  %v294 = vmul.f32 %v275, %v292
  %v295 = vpack.c.bf16 %v294, %v294
  %297 = vrot.lane.b32.xlu0 %v295, 32
  %v298 = vpop.permute.xlu0 %297
  %v300 = vsel %vm121, %v298, 0
  %302 = vmatpush.bf16.msra.mxu0 0
  %303 = vmatpush.bf16.msra.mxu0 0
  %304 = vmatpush.bf16.msra.mxu0 0
  %305 = vmatpush.bf16.msra.mxu0 0
  %306 = vmatpush.bf16.msra.mxu0 0
  %307 = vmatpush.bf16.msra.mxu0 0
  %308 = vmatpush.bf16.msra.mxu0 %v118
  %309 = vmatpush.bf16.msra.mxu0 %v117
  %310 = vmatmul.bf16.gmra.mxu0 %v300
  %v311 = vpop.f32.mrf.mxu0
  %v312 = vadd.f32 0.0, %v311
  %v313 = vpop.f32.mrf.mxu0
  %314 = vdwg.mxu0
  %v315 = vadd.f32 %v86, %v312
  %v316 = vxor.u32 %v315, 2147483648
  %v317 = vmul.f32 %v316, 1.442695
  %v318 = vpow.pop %v317
  %v319 = vadd.f32 %v318, 1.0
  %v320 = vrcp.pop %v319
  %v321 = vmul.f32 %v319, %v320
  %v322 = vsub.f32 1.0, %v321
  %v323 = vmul.f32 %v320, %v322
  %v324 = vadd.f32 %v320, %v323
  %vm325 = vweird.f32 %v319
  %vm326 = vweird.f32 %v320
  %vm327 = vmor %vm325, %vm326
  %v328 = vsel %vm327, %v320, %v324
  %v329 = vand.u32 2147483647, %v319
  %vm330 = vcmp.eq.f32.partialorder %v329, 8.507059e+37
  %v331 = vand.u32 %v319, 2147483648
  %v332 = vor.u32 1.1754944e-38, %v331
  %v333 = vsel %vm330, %v332, %v328
  %v334 = vmul.f32 1.0, %v333
  %v335 = vmul.f32 %v334, 2.0
  %v336 = vsub.f32 %v335, 1.0
  %v337 = vmul.f32 %v334, %v288
  %339 = vrot.lane.b32.xlu0 %v336, 64
  %v340 = vpop.permute.xlu0 %339
  %v342 = vmul.f32 %v334, %v340
  %344 = vrot.lane.b32.xlu0 %v342, 32
  %v345 = vpop.permute.xlu0 %344
  %v347 = vadd.f32 %v337, %v345
  %v348 = vtanh.pop %v347
  %350 = vrot.lane.b32.xlu0 %v348, 64
  %v351 = vpop.permute.xlu0 %350
  %v353 = vmul.f32 %v334, %v351
  %v354 = vpack.c.bf16 %v353, %v353
  %356 = vrot.lane.b32.xlu0 %v354, 32
  %v357 = vpop.permute.xlu0 %356
  %v359 = vsel %vm121, %v357, 0
  %361 = vmatpush.bf16.msra.mxu0 0
  %362 = vmatpush.bf16.msra.mxu0 0
  %363 = vmatpush.bf16.msra.mxu0 0
  %364 = vmatpush.bf16.msra.mxu0 0
  %365 = vmatpush.bf16.msra.mxu0 0
  %366 = vmatpush.bf16.msra.mxu0 0
  %367 = vmatpush.bf16.msra.mxu0 %v118
  %368 = vmatpush.bf16.msra.mxu0 %v117
  %369 = vmatmul.bf16.gmra.mxu0 %v359
  %v370 = vpop.f32.mrf.mxu0
  %v371 = vadd.f32 0.0, %v370
  %v372 = vpop.f32.mrf.mxu0
  %373 = vdwg.mxu0
  %v374 = vadd.f32 %v87, %v371
  %v375 = vxor.u32 %v374, 2147483648
  %v376 = vmul.f32 %v375, 1.442695
  %v377 = vpow.pop %v376
  %v378 = vadd.f32 %v377, 1.0
  %v379 = vrcp.pop %v378
  %v380 = vmul.f32 %v378, %v379
  %v381 = vsub.f32 1.0, %v380
  %v382 = vmul.f32 %v379, %v381
  %v383 = vadd.f32 %v379, %v382
  %vm384 = vweird.f32 %v378
  %vm385 = vweird.f32 %v379
  %vm386 = vmor %vm384, %vm385
  %v387 = vsel %vm386, %v379, %v383
  %v388 = vand.u32 2147483647, %v378
  %vm389 = vcmp.eq.f32.partialorder %v388, 8.507059e+37
  %v390 = vand.u32 %v378, 2147483648
  %v391 = vor.u32 1.1754944e-38, %v390
  %v392 = vsel %vm389, %v391, %v387
  %v393 = vmul.f32 1.0, %v392
  %v394 = vmul.f32 %v393, 2.0
  %v395 = vsub.f32 %v394, 1.0
  %v396 = vmul.f32 %v393, %v347
  %398 = vrot.lane.b32.xlu0 %v395, 64
  %v399 = vpop.permute.xlu0 %398
  %v401 = vmul.f32 %v393, %v399
  %403 = vrot.lane.b32.xlu0 %v401, 32
  %v404 = vpop.permute.xlu0 %403
  %v406 = vadd.f32 %v396, %v404
  %v407 = vtanh.pop %v406
  %409 = vrot.lane.b32.xlu0 %v407, 64
  %v410 = vpop.permute.xlu0 %409
  %v412 = vmul.f32 %v393, %v410
  %v413 = vpack.c.bf16 %v412, %v412
  %415 = vrot.lane.b32.xlu0 %v413, 32
  %v416 = vpop.permute.xlu0 %415
  %v418 = vsel %vm121, %v416, 0
  %420 = vmatpush.bf16.msra.mxu0 0
  %421 = vmatpush.bf16.msra.mxu0 0
  %422 = vmatpush.bf16.msra.mxu0 0
  %423 = vmatpush.bf16.msra.mxu0 0
  %424 = vmatpush.bf16.msra.mxu0 0
  %425 = vmatpush.bf16.msra.mxu0 0
  %426 = vmatpush.bf16.msra.mxu0 %v118
  %427 = vmatpush.bf16.msra.mxu0 %v117
  %428 = vmatmul.bf16.gmra.mxu0 %v418
  %v429 = vpop.f32.mrf.mxu0
  %v430 = vadd.f32 0.0, %v429
  %v431 = vpop.f32.mrf.mxu0
  %432 = vdwg.mxu0
  %v433 = vadd.f32 %v88, %v430
  %v434 = vxor.u32 %v433, 2147483648
  %v435 = vmul.f32 %v434, 1.442695
  %v436 = vpow.pop %v435
  %v437 = vadd.f32 %v436, 1.0
  %v438 = vrcp.pop %v437
  %v439 = vmul.f32 %v437, %v438
  %v440 = vsub.f32 1.0, %v439
  %v441 = vmul.f32 %v438, %v440
  %v442 = vadd.f32 %v438, %v441
  %vm443 = vweird.f32 %v437
  %vm444 = vweird.f32 %v438
  %vm445 = vmor %vm443, %vm444
  %v446 = vsel %vm445, %v438, %v442
  %v447 = vand.u32 2147483647, %v437
  %vm448 = vcmp.eq.f32.partialorder %v447, 8.507059e+37
  %v449 = vand.u32 %v437, 2147483648
  %v450 = vor.u32 1.1754944e-38, %v449
  %v451 = vsel %vm448, %v450, %v446
  %v452 = vmul.f32 1.0, %v451
  %v453 = vmul.f32 %v452, 2.0
  %v454 = vsub.f32 %v453, 1.0
  %v455 = vmul.f32 %v452, %v406
  %457 = vrot.lane.b32.xlu0 %v454, 64
  %v458 = vpop.permute.xlu0 %457
  %v460 = vmul.f32 %v452, %v458
  %462 = vrot.lane.b32.xlu0 %v460, 32
  %v463 = vpop.permute.xlu0 %462
  %v465 = vadd.f32 %v455, %v463
  %v466 = vtanh.pop %v465
  %468 = vrot.lane.b32.xlu0 %v466, 64
  %v469 = vpop.permute.xlu0 %468
  %v471 = vmul.f32 %v452, %v469
  %v472 = vpack.c.bf16 %v471, %v471
  %474 = vrot.lane.b32.xlu0 %v472, 32
  %v475 = vpop.permute.xlu0 %474
  %v477 = vsel %vm121, %v475, 0
  %479 = vmatpush.bf16.msra.mxu0 0
  %480 = vmatpush.bf16.msra.mxu0 0
  %481 = vmatpush.bf16.msra.mxu0 0
  %482 = vmatpush.bf16.msra.mxu0 0
  %483 = vmatpush.bf16.msra.mxu0 0
  %484 = vmatpush.bf16.msra.mxu0 0
  %485 = vmatpush.bf16.msra.mxu0 %v118
  %486 = vmatpush.bf16.msra.mxu0 %v117
  %487 = vmatmul.bf16.gmra.mxu0 %v477
  %v488 = vpop.f32.mrf.mxu0
  %v489 = vadd.f32 0.0, %v488
  %v490 = vpop.f32.mrf.mxu0
  %491 = vdwg.mxu0
  %v492 = vadd.f32 %v89, %v489
  %v493 = vxor.u32 %v492, 2147483648
  %v494 = vmul.f32 %v493, 1.442695
  %v495 = vpow.pop %v494
  %v496 = vadd.f32 %v495, 1.0
  %v497 = vrcp.pop %v496
  %v498 = vmul.f32 %v496, %v497
  %v499 = vsub.f32 1.0, %v498
  %v500 = vmul.f32 %v497, %v499
  %v501 = vadd.f32 %v497, %v500
  %vm502 = vweird.f32 %v496
  %vm503 = vweird.f32 %v497
  %vm504 = vmor %vm502, %vm503
  %v505 = vsel %vm504, %v497, %v501
  %v506 = vand.u32 2147483647, %v496
  %vm507 = vcmp.eq.f32.partialorder %v506, 8.507059e+37
  %v508 = vand.u32 %v496, 2147483648
  %v509 = vor.u32 1.1754944e-38, %v508
  %v510 = vsel %vm507, %v509, %v505
  %v511 = vmul.f32 1.0, %v510
  %v512 = vmul.f32 %v511, 2.0
  %v513 = vsub.f32 %v512, 1.0
  %v514 = vmul.f32 %v511, %v465
  %516 = vrot.lane.b32.xlu0 %v513, 64
  %v517 = vpop.permute.xlu0 %516
  %v519 = vmul.f32 %v511, %v517
  %521 = vrot.lane.b32.xlu0 %v519, 32
  %v522 = vpop.permute.xlu0 %521
  %v524 = vadd.f32 %v514, %v522
  %v525 = vtanh.pop %v524
  %527 = vrot.lane.b32.xlu0 %v525, 64
  %v528 = vpop.permute.xlu0 %527
  %v530 = vmul.f32 %v511, %v528
  %v531 = vpack.c.bf16 %v530, %v530
  %533 = vrot.lane.b32.xlu0 %v531, 32
  %v534 = vpop.permute.xlu0 %533
  %v536 = vsel %vm121, %v534, 0
  %538 = vmatpush.bf16.msra.mxu0 0
  %539 = vmatpush.bf16.msra.mxu0 0
  %540 = vmatpush.bf16.msra.mxu0 0
  %541 = vmatpush.bf16.msra.mxu0 0
  %542 = vmatpush.bf16.msra.mxu0 0
  %543 = vmatpush.bf16.msra.mxu0 0
  %544 = vmatpush.bf16.msra.mxu0 %v118
  %545 = vmatpush.bf16.msra.mxu0 %v117
  %546 = vmatmul.bf16.gmra.mxu0 %v536
  %v547 = vpop.f32.mrf.mxu0
  %v548 = vadd.f32 0.0, %v547
  %v549 = vpop.f32.mrf.mxu0
  %550 = vdwg.mxu0
  %v551 = vadd.f32 %v90, %v548
  %v552 = vxor.u32 %v551, 2147483648
  %v553 = vmul.f32 %v552, 1.442695
  %v554 = vpow.pop %v553
  %v555 = vadd.f32 %v554, 1.0
  %v556 = vrcp.pop %v555
  %v557 = vmul.f32 %v555, %v556
  %v558 = vsub.f32 1.0, %v557
  %v559 = vmul.f32 %v556, %v558
  %v560 = vadd.f32 %v556, %v559
  %vm561 = vweird.f32 %v555
  %vm562 = vweird.f32 %v556
  %vm563 = vmor %vm561, %vm562
  %v564 = vsel %vm563, %v556, %v560
  %v565 = vand.u32 2147483647, %v555
  %vm566 = vcmp.eq.f32.partialorder %v565, 8.507059e+37
  %v567 = vand.u32 %v555, 2147483648
  %v568 = vor.u32 1.1754944e-38, %v567
  %v569 = vsel %vm566, %v568, %v564
  %v570 = vmul.f32 1.0, %v569
  %v571 = vmul.f32 %v570, 2.0
  %v572 = vsub.f32 %v571, 1.0
  %v573 = vmul.f32 %v570, %v524
  %575 = vrot.lane.b32.xlu0 %v572, 64
  %v576 = vpop.permute.xlu0 %575
  %v578 = vmul.f32 %v570, %v576
  %580 = vrot.lane.b32.xlu0 %v578, 32
  %v581 = vpop.permute.xlu0 %580
  %v583 = vadd.f32 %v573, %v581
  %v584 = vtanh.pop %v583
  %586 = vrot.lane.b32.xlu0 %v584, 64
  %v587 = vpop.permute.xlu0 %586
  %v589 = vmul.f32 %v570, %v587
  %v590 = vpack.c.bf16 %v589, %v589
  %592 = vrot.lane.b32.xlu0 %v590, 32
  %v593 = vpop.permute.xlu0 %592
  %v598 = vunpack.c.l.b16 %v29
  %v599 = vunpack.c.l.b16 %v30
  %v600 = vunpack.c.l.b16 %v31
  %v601 = vunpack.c.l.b16 %v32
  %v602 = vpack.c.b16 %v599, %v598
  %v603 = vpack.c.b16 %v601, %v600
  %v607 = vsel %vm121, %v593, 0
  %609 = vmatpush.bf16.msra.mxu0 0
  %610 = vmatpush.bf16.msra.mxu0 0
  %611 = vmatpush.bf16.msra.mxu0 0
  %612 = vmatpush.bf16.msra.mxu0 0
  %613 = vmatpush.bf16.msra.mxu0 0
  %614 = vmatpush.bf16.msra.mxu0 0
  %615 = vmatpush.bf16.msra.mxu0 %v603
  %616 = vmatpush.bf16.msra.mxu0 %v602
  %617 = vmatmul.bf16.gmra.mxu0 %v607
  %v618 = vpop.f32.mrf.mxu0
  %v619 = vadd.f32 0.0, %v618
  %v620 = vpop.f32.mrf.mxu0
  %621 = vdwg.mxu0
  %v622 = vadd.f32 %v101, %v619
  %v623 = vxor.u32 %v622, 2147483648
  %v624 = vmul.f32 %v623, 1.442695
  %v625 = vpow.pop %v624
  %v626 = vadd.f32 %v625, 1.0
  %v627 = vrcp.pop %v626
  %v628 = vmul.f32 %v626, %v627
  %v629 = vsub.f32 1.0, %v628
  %v630 = vmul.f32 %v627, %v629
  %v631 = vadd.f32 %v627, %v630
  %vm632 = vweird.f32 %v626
  %vm633 = vweird.f32 %v627
  %vm634 = vmor %vm632, %vm633
  %v635 = vsel %vm634, %v627, %v631
  %v636 = vand.u32 2147483647, %v626
  %vm637 = vcmp.eq.f32.partialorder %v636, 8.507059e+37
  %v638 = vand.u32 %v626, 2147483648
  %v639 = vor.u32 1.1754944e-38, %v638
  %v640 = vsel %vm637, %v639, %v635
  %v641 = vmul.f32 1.0, %v640
  %v642 = vmul.f32 %v641, 2.0
  %v643 = vsub.f32 %v642, 1.0
  %v644 = vmul.f32 %v641, 0.0
  %646 = vrot.lane.b32.xlu0 %v643, 64
  %v647 = vpop.permute.xlu0 %646
  %v649 = vmul.f32 %v641, %v647
  %651 = vrot.lane.b32.xlu0 %v649, 32
  %v652 = vpop.permute.xlu0 %651
  %v654 = vadd.f32 %v644, %v652
  %v655 = vtanh.pop %v654
  %657 = vrot.lane.b32.xlu0 %v655, 64
  %v658 = vpop.permute.xlu0 %657
  %v660 = vmul.f32 %v641, %v658
  %v661 = vpack.c.bf16 %v660, %v660
  %663 = vrot.lane.b32.xlu0 %v661, 32
  %v664 = vpop.permute.xlu0 %663
  %v666 = vsel %vm121, %v664, 0
  %668 = vmatpush.bf16.msra.mxu0 0
  %669 = vmatpush.bf16.msra.mxu0 0
  %670 = vmatpush.bf16.msra.mxu0 0
  %671 = vmatpush.bf16.msra.mxu0 0
  %672 = vmatpush.bf16.msra.mxu0 0
  %673 = vmatpush.bf16.msra.mxu0 0
  %674 = vmatpush.bf16.msra.mxu0 %v603
  %675 = vmatpush.bf16.msra.mxu0 %v602
  %676 = vmatmul.bf16.gmra.mxu0 %v666
  %v677 = vpop.f32.mrf.mxu0
  %v678 = vadd.f32 0.0, %v677
  %v679 = vpop.f32.mrf.mxu0
  %680 = vdwg.mxu0
  %v681 = vadd.f32 %v102, %v678
  %v682 = vxor.u32 %v681, 2147483648
  %v683 = vmul.f32 %v682, 1.442695
  %v684 = vpow.pop %v683
  %v685 = vadd.f32 %v684, 1.0
  %v686 = vrcp.pop %v685
  %v687 = vmul.f32 %v685, %v686
  %v688 = vsub.f32 1.0, %v687
  %v689 = vmul.f32 %v686, %v688
  %v690 = vadd.f32 %v686, %v689
  %vm691 = vweird.f32 %v685
  %vm692 = vweird.f32 %v686
  %vm693 = vmor %vm691, %vm692
  %v694 = vsel %vm693, %v686, %v690
  %v695 = vand.u32 2147483647, %v685
  %vm696 = vcmp.eq.f32.partialorder %v695, 8.507059e+37
  %v697 = vand.u32 %v685, 2147483648
  %v698 = vor.u32 1.1754944e-38, %v697
  %v699 = vsel %vm696, %v698, %v694
  %v700 = vmul.f32 1.0, %v699
  %v701 = vmul.f32 %v700, 2.0
  %v702 = vsub.f32 %v701, 1.0
  %v703 = vmul.f32 %v700, %v654
  %705 = vrot.lane.b32.xlu0 %v702, 64
  %v706 = vpop.permute.xlu0 %705
  %v708 = vmul.f32 %v700, %v706
  %710 = vrot.lane.b32.xlu0 %v708, 32
  %v711 = vpop.permute.xlu0 %710
  %v713 = vadd.f32 %v703, %v711
  %v714 = vtanh.pop %v713
  %716 = vrot.lane.b32.xlu0 %v714, 64
  %v717 = vpop.permute.xlu0 %716
  %v719 = vmul.f32 %v700, %v717
  %v720 = vpack.c.bf16 %v719, %v719
  %722 = vrot.lane.b32.xlu0 %v720, 32
  %v723 = vpop.permute.xlu0 %722
  %v725 = vsel %vm121, %v723, 0
  %727 = vmatpush.bf16.msra.mxu0 0
  %728 = vmatpush.bf16.msra.mxu0 0
  %729 = vmatpush.bf16.msra.mxu0 0
  %730 = vmatpush.bf16.msra.mxu0 0
  %731 = vmatpush.bf16.msra.mxu0 0
  %732 = vmatpush.bf16.msra.mxu0 0
  %733 = vmatpush.bf16.msra.mxu0 %v603
  %734 = vmatpush.bf16.msra.mxu0 %v602
  %735 = vmatmul.bf16.gmra.mxu0 %v725
  %v736 = vpop.f32.mrf.mxu0
  %v737 = vadd.f32 0.0, %v736
  %v738 = vpop.f32.mrf.mxu0
  %739 = vdwg.mxu0
  %v740 = vadd.f32 %v103, %v737
  %v741 = vxor.u32 %v740, 2147483648
  %v742 = vmul.f32 %v741, 1.442695
  %v743 = vpow.pop %v742
  %v744 = vadd.f32 %v743, 1.0
  %v745 = vrcp.pop %v744
  %v746 = vmul.f32 %v744, %v745
  %v747 = vsub.f32 1.0, %v746
  %v748 = vmul.f32 %v745, %v747
  %v749 = vadd.f32 %v745, %v748
  %vm750 = vweird.f32 %v744
  %vm751 = vweird.f32 %v745
  %vm752 = vmor %vm750, %vm751
  %v753 = vsel %vm752, %v745, %v749
  %v754 = vand.u32 2147483647, %v744
  %vm755 = vcmp.eq.f32.partialorder %v754, 8.507059e+37
  %v756 = vand.u32 %v744, 2147483648
  %v757 = vor.u32 1.1754944e-38, %v756
  %v758 = vsel %vm755, %v757, %v753
  %v759 = vmul.f32 1.0, %v758
  %v760 = vmul.f32 %v759, 2.0
  %v761 = vsub.f32 %v760, 1.0
  %v762 = vmul.f32 %v759, %v713
  %764 = vrot.lane.b32.xlu0 %v761, 64
  %v765 = vpop.permute.xlu0 %764
  %v767 = vmul.f32 %v759, %v765
  %769 = vrot.lane.b32.xlu0 %v767, 32
  %v770 = vpop.permute.xlu0 %769
  %v772 = vadd.f32 %v762, %v770
  %v773 = vtanh.pop %v772
  %775 = vrot.lane.b32.xlu0 %v773, 64
  %v776 = vpop.permute.xlu0 %775
  %v778 = vmul.f32 %v759, %v776
  %v779 = vpack.c.bf16 %v778, %v778
  %781 = vrot.lane.b32.xlu0 %v779, 32
  %v782 = vpop.permute.xlu0 %781
  %v784 = vsel %vm121, %v782, 0
  %786 = vmatpush.bf16.msra.mxu0 0
  %787 = vmatpush.bf16.msra.mxu0 0
  %788 = vmatpush.bf16.msra.mxu0 0
  %789 = vmatpush.bf16.msra.mxu0 0
  %790 = vmatpush.bf16.msra.mxu0 0
  %791 = vmatpush.bf16.msra.mxu0 0
  %792 = vmatpush.bf16.msra.mxu0 %v603
  %793 = vmatpush.bf16.msra.mxu0 %v602
  %794 = vmatmul.bf16.gmra.mxu0 %v784
  %v795 = vpop.f32.mrf.mxu0
  %v796 = vadd.f32 0.0, %v795
  %v797 = vpop.f32.mrf.mxu0
  %798 = vdwg.mxu0
  %v799 = vadd.f32 %v104, %v796
  %v800 = vxor.u32 %v799, 2147483648
  %v801 = vmul.f32 %v800, 1.442695
  %v802 = vpow.pop %v801
  %v803 = vadd.f32 %v802, 1.0
  %v804 = vrcp.pop %v803
  %v805 = vmul.f32 %v803, %v804
  %v806 = vsub.f32 1.0, %v805
  %v807 = vmul.f32 %v804, %v806
  %v808 = vadd.f32 %v804, %v807
  %vm809 = vweird.f32 %v803
  %vm810 = vweird.f32 %v804
  %vm811 = vmor %vm809, %vm810
  %v812 = vsel %vm811, %v804, %v808
  %v813 = vand.u32 2147483647, %v803
  %vm814 = vcmp.eq.f32.partialorder %v813, 8.507059e+37
  %v815 = vand.u32 %v803, 2147483648
  %v816 = vor.u32 1.1754944e-38, %v815
  %v817 = vsel %vm814, %v816, %v812
  %v818 = vmul.f32 1.0, %v817
  %v819 = vmul.f32 %v818, 2.0
  %v820 = vsub.f32 %v819, 1.0
  %v821 = vmul.f32 %v818, %v772
  %823 = vrot.lane.b32.xlu0 %v820, 64
  %v824 = vpop.permute.xlu0 %823
  %v826 = vmul.f32 %v818, %v824
  %828 = vrot.lane.b32.xlu0 %v826, 32
  %v829 = vpop.permute.xlu0 %828
  %v831 = vadd.f32 %v821, %v829
  %v832 = vtanh.pop %v831
  %834 = vrot.lane.b32.xlu0 %v832, 64
  %v835 = vpop.permute.xlu0 %834
  %v837 = vmul.f32 %v818, %v835
  %v838 = vpack.c.bf16 %v837, %v837
  %840 = vrot.lane.b32.xlu0 %v838, 32
  %v841 = vpop.permute.xlu0 %840
  %v843 = vsel %vm121, %v841, 0
  %845 = vmatpush.bf16.msra.mxu0 0
  %846 = vmatpush.bf16.msra.mxu0 0
  %847 = vmatpush.bf16.msra.mxu0 0
  %848 = vmatpush.bf16.msra.mxu0 0
  %849 = vmatpush.bf16.msra.mxu0 0
  %850 = vmatpush.bf16.msra.mxu0 0
  %851 = vmatpush.bf16.msra.mxu0 %v603
  %852 = vmatpush.bf16.msra.mxu0 %v602
  %853 = vmatmul.bf16.gmra.mxu0 %v843
  %v854 = vpop.f32.mrf.mxu0
  %v855 = vadd.f32 0.0, %v854
  %v856 = vpop.f32.mrf.mxu0
  %857 = vdwg.mxu0
  %v858 = vadd.f32 %v105, %v855
  %v859 = vxor.u32 %v858, 2147483648
  %v860 = vmul.f32 %v859, 1.442695
  %v861 = vpow.pop %v860
  %v862 = vadd.f32 %v861, 1.0
  %v863 = vrcp.pop %v862
  %v864 = vmul.f32 %v862, %v863
  %v865 = vsub.f32 1.0, %v864
  %v866 = vmul.f32 %v863, %v865
  %v867 = vadd.f32 %v863, %v866
  %vm868 = vweird.f32 %v862
  %vm869 = vweird.f32 %v863
  %vm870 = vmor %vm868, %vm869
  %v871 = vsel %vm870, %v863, %v867
  %v872 = vand.u32 2147483647, %v862
  %vm873 = vcmp.eq.f32.partialorder %v872, 8.507059e+37
  %v874 = vand.u32 %v862, 2147483648
  %v875 = vor.u32 1.1754944e-38, %v874
  %v876 = vsel %vm873, %v875, %v871
  %v877 = vmul.f32 1.0, %v876
  %v878 = vmul.f32 %v877, 2.0
  %v879 = vsub.f32 %v878, 1.0
  %v880 = vmul.f32 %v877, %v831
  %882 = vrot.lane.b32.xlu0 %v879, 64
  %v883 = vpop.permute.xlu0 %882
  %v885 = vmul.f32 %v877, %v883
  %887 = vrot.lane.b32.xlu0 %v885, 32
  %v888 = vpop.permute.xlu0 %887
  %v890 = vadd.f32 %v880, %v888
  %v891 = vtanh.pop %v890
  %893 = vrot.lane.b32.xlu0 %v891, 64
  %v894 = vpop.permute.xlu0 %893
  %v896 = vmul.f32 %v877, %v894
  %v897 = vpack.c.bf16 %v896, %v896
  %899 = vrot.lane.b32.xlu0 %v897, 32
  %v900 = vpop.permute.xlu0 %899
  %v902 = vsel %vm121, %v900, 0
  %904 = vmatpush.bf16.msra.mxu0 0
  %905 = vmatpush.bf16.msra.mxu0 0
  %906 = vmatpush.bf16.msra.mxu0 0
  %907 = vmatpush.bf16.msra.mxu0 0
  %908 = vmatpush.bf16.msra.mxu0 0
  %909 = vmatpush.bf16.msra.mxu0 0
  %910 = vmatpush.bf16.msra.mxu0 %v603
  %911 = vmatpush.bf16.msra.mxu0 %v602
  %912 = vmatmul.bf16.gmra.mxu0 %v902
  %v913 = vpop.f32.mrf.mxu0
  %v914 = vadd.f32 0.0, %v913
  %v915 = vpop.f32.mrf.mxu0
  %916 = vdwg.mxu0
  %v917 = vadd.f32 %v106, %v914
  %v918 = vxor.u32 %v917, 2147483648
  %v919 = vmul.f32 %v918, 1.442695
  %v920 = vpow.pop %v919
  %v921 = vadd.f32 %v920, 1.0
  %v922 = vrcp.pop %v921
  %v923 = vmul.f32 %v921, %v922
  %v924 = vsub.f32 1.0, %v923
  %v925 = vmul.f32 %v922, %v924
  %v926 = vadd.f32 %v922, %v925
  %vm927 = vweird.f32 %v921
  %vm928 = vweird.f32 %v922
  %vm929 = vmor %vm927, %vm928
  %v930 = vsel %vm929, %v922, %v926
  %v931 = vand.u32 2147483647, %v921
  %vm932 = vcmp.eq.f32.partialorder %v931, 8.507059e+37
  %v933 = vand.u32 %v921, 2147483648
  %v934 = vor.u32 1.1754944e-38, %v933
  %v935 = vsel %vm932, %v934, %v930
  %v936 = vmul.f32 1.0, %v935
  %v937 = vmul.f32 %v936, 2.0
  %v938 = vsub.f32 %v937, 1.0
  %v939 = vmul.f32 %v936, %v890
  %941 = vrot.lane.b32.xlu0 %v938, 64
  %v942 = vpop.permute.xlu0 %941
  %v944 = vmul.f32 %v936, %v942
  %946 = vrot.lane.b32.xlu0 %v944, 32
  %v947 = vpop.permute.xlu0 %946
  %v949 = vadd.f32 %v939, %v947
  %v950 = vtanh.pop %v949
  %952 = vrot.lane.b32.xlu0 %v950, 64
  %v953 = vpop.permute.xlu0 %952
  %v955 = vmul.f32 %v936, %v953
  %v956 = vpack.c.bf16 %v955, %v955
  %958 = vrot.lane.b32.xlu0 %v956, 32
  %v959 = vpop.permute.xlu0 %958
  %v961 = vsel %vm121, %v959, 0
  %963 = vmatpush.bf16.msra.mxu0 0
  %964 = vmatpush.bf16.msra.mxu0 0
  %965 = vmatpush.bf16.msra.mxu0 0
  %966 = vmatpush.bf16.msra.mxu0 0
  %967 = vmatpush.bf16.msra.mxu0 0
  %968 = vmatpush.bf16.msra.mxu0 0
  %969 = vmatpush.bf16.msra.mxu0 %v603
  %970 = vmatpush.bf16.msra.mxu0 %v602
  %971 = vmatmul.bf16.gmra.mxu0 %v961
  %v972 = vpop.f32.mrf.mxu0
  %v973 = vadd.f32 0.0, %v972
  %v974 = vpop.f32.mrf.mxu0
  %975 = vdwg.mxu0
  %v976 = vadd.f32 %v107, %v973
  %v977 = vxor.u32 %v976, 2147483648
  %v978 = vmul.f32 %v977, 1.442695
  %v979 = vpow.pop %v978
  %v980 = vadd.f32 %v979, 1.0
  %v981 = vrcp.pop %v980
  %v982 = vmul.f32 %v980, %v981
  %v983 = vsub.f32 1.0, %v982
  %v984 = vmul.f32 %v981, %v983
  %v985 = vadd.f32 %v981, %v984
  %vm986 = vweird.f32 %v980
  %vm987 = vweird.f32 %v981
  %vm988 = vmor %vm986, %vm987
  %v989 = vsel %vm988, %v981, %v985
  %v990 = vand.u32 2147483647, %v980
  %vm991 = vcmp.eq.f32.partialorder %v990, 8.507059e+37
  %v992 = vand.u32 %v980, 2147483648
  %v993 = vor.u32 1.1754944e-38, %v992
  %v994 = vsel %vm991, %v993, %v989
  %v995 = vmul.f32 1.0, %v994
  %v996 = vmul.f32 %v995, 2.0
  %v997 = vsub.f32 %v996, 1.0
  %v998 = vmul.f32 %v995, %v949
  %1000 = vrot.lane.b32.xlu0 %v997, 64
  %v1001 = vpop.permute.xlu0 %1000
  %v1003 = vmul.f32 %v995, %v1001
  %1005 = vrot.lane.b32.xlu0 %v1003, 32
  %v1006 = vpop.permute.xlu0 %1005
  %v1008 = vadd.f32 %v998, %v1006
  %v1009 = vtanh.pop %v1008
  %1011 = vrot.lane.b32.xlu0 %v1009, 64
  %v1012 = vpop.permute.xlu0 %1011
  %v1014 = vmul.f32 %v995, %v1012
  %v1015 = vpack.c.bf16 %v1014, %v1014
  %1017 = vrot.lane.b32.xlu0 %v1015, 32
  %v1018 = vpop.permute.xlu0 %1017
  %v1020 = vsel %vm121, %v1018, 0
  %1022 = vmatpush.bf16.msra.mxu0 0
  %1023 = vmatpush.bf16.msra.mxu0 0
  %1024 = vmatpush.bf16.msra.mxu0 0
  %1025 = vmatpush.bf16.msra.mxu0 0
  %1026 = vmatpush.bf16.msra.mxu0 0
  %1027 = vmatpush.bf16.msra.mxu0 0
  %1028 = vmatpush.bf16.msra.mxu0 %v603
  %1029 = vmatpush.bf16.msra.mxu0 %v602
  %1030 = vmatmul.bf16.gmra.mxu0 %v1020
  %v1031 = vpop.f32.mrf.mxu0
  %v1032 = vadd.f32 0.0, %v1031
  %v1033 = vpop.f32.mrf.mxu0
  %1034 = vdwg.mxu0
  %v1035 = vadd.f32 %v108, %v1032
  %v1036 = vxor.u32 %v1035, 2147483648
  %v1037 = vmul.f32 %v1036, 1.442695
  %v1038 = vpow.pop %v1037
  %v1039 = vadd.f32 %v1038, 1.0
  %v1040 = vrcp.pop %v1039
  %v1041 = vmul.f32 %v1039, %v1040
  %v1042 = vsub.f32 1.0, %v1041
  %v1043 = vmul.f32 %v1040, %v1042
  %v1044 = vadd.f32 %v1040, %v1043
  %vm1045 = vweird.f32 %v1039
  %vm1046 = vweird.f32 %v1040
  %vm1047 = vmor %vm1045, %vm1046
  %v1048 = vsel %vm1047, %v1040, %v1044
  %v1049 = vand.u32 2147483647, %v1039
  %vm1050 = vcmp.eq.f32.partialorder %v1049, 8.507059e+37
  %v1051 = vand.u32 %v1039, 2147483648
  %v1052 = vor.u32 1.1754944e-38, %v1051
  %v1053 = vsel %vm1050, %v1052, %v1048
  %v1054 = vmul.f32 1.0, %v1053
  %v1055 = vmul.f32 %v1054, 2.0
  %v1056 = vsub.f32 %v1055, 1.0
  %v1057 = vmul.f32 %v1054, %v1008
  %1059 = vrot.lane.b32.xlu0 %v1056, 64
  %v1060 = vpop.permute.xlu0 %1059
  %v1062 = vmul.f32 %v1054, %v1060
  %1064 = vrot.lane.b32.xlu0 %v1062, 32
  %v1065 = vpop.permute.xlu0 %1064
  %v1067 = vadd.f32 %v1057, %v1065
  %v1068 = vtanh.pop %v1067
  %1070 = vrot.lane.b32.xlu0 %v1068, 64
  %v1071 = vpop.permute.xlu0 %1070
  %v1073 = vmul.f32 %v1054, %v1071
  %v1074 = vperm.slane %v23, 4
  %1076 = vrot.lane.b32.xlu0 %v1074, 96
  %v1077 = vpop.permute.xlu0 %1076
  %v1079 = vmul.f32 %v660, %v1077
  %v1080 = vmul.f32 %v719, %v1077
  %v1081 = vmul.f32 %v778, %v1077
  %v1082 = vmul.f32 %v837, %v1077
  %v1083 = vmul.f32 %v896, %v1077
  %v1084 = vmul.f32 %v955, %v1077
  %v1085 = vmul.f32 %v1014, %v1077
  %v1086 = vmul.f32 %v1073, %v1077
  %1095 = vrot.lane.b32.xlu0 %v1079, 32
  %v1096 = vpop.permute.xlu0 %1095
  %1097 = vrot.lane.b32.xlu0 %v1080, 32
  %v1098 = vpop.permute.xlu0 %1097
  %1099 = vrot.lane.b32.xlu0 %v1081, 32
  %v1100 = vpop.permute.xlu0 %1099
  %1101 = vrot.lane.b32.xlu0 %v1082, 32
  %v1102 = vpop.permute.xlu0 %1101
  %1103 = vrot.lane.b32.xlu0 %v1083, 32
  %v1104 = vpop.permute.xlu0 %1103
  %1105 = vrot.lane.b32.xlu0 %v1084, 32
  %v1106 = vpop.permute.xlu0 %1105
  %1107 = vrot.lane.b32.xlu0 %v1085, 32
  %v1108 = vpop.permute.xlu0 %1107
  %1109 = vrot.lane.b32.xlu0 %v1086, 32
  %v1110 = vpop.permute.xlu0 %1109
  %vm1119 = vcmask 254976
  %v1120 = vsel %vm1119, %v1096, 0.0
  %1121 = vadd.xlane.f32.xlu0 %v1120
  %v1122 = vpop.xlane.xlu0 %1121
  %v1123 = vsel %vm1119, %v1098, 0.0
  %1124 = vadd.xlane.f32.xlu0 %v1123
  %v1125 = vpop.xlane.xlu0 %1124
  %v1126 = vsel %vm1119, %v1100, 0.0
  %1127 = vadd.xlane.f32.xlu0 %v1126
  %v1128 = vpop.xlane.xlu0 %1127
  %v1129 = vsel %vm1119, %v1102, 0.0
  %1130 = vadd.xlane.f32.xlu0 %v1129
  %v1131 = vpop.xlane.xlu0 %1130
  %v1132 = vsel %vm1119, %v1104, 0.0
  %1133 = vadd.xlane.f32.xlu0 %v1132
  %v1134 = vpop.xlane.xlu0 %1133
  %v1135 = vsel %vm1119, %v1106, 0.0
  %1136 = vadd.xlane.f32.xlu0 %v1135
  %v1137 = vpop.xlane.xlu0 %1136
  %v1138 = vsel %vm1119, %v1108, 0.0
  %1139 = vadd.xlane.f32.xlu0 %v1138
  %v1140 = vpop.xlane.xlu0 %1139
  %v1141 = vsel %vm1119, %v1110, 0.0
  %1142 = vadd.xlane.f32.xlu0 %v1141
  %v1143 = vpop.xlane.xlu0 %1142
  %v1145 = vrot.slane %v23, 5
  %s1146 = vtos %v1145
  %v1147 = vstv %s1146
  %v1149 = vadd.f32 %v1122, %v1147
  %v1150 = vadd.f32 %v1125, %v1147
  %v1151 = vadd.f32 %v1128, %v1147
  %v1152 = vadd.f32 %v1131, %v1147
  %v1153 = vadd.f32 %v1134, %v1147
  %v1154 = vadd.f32 %v1137, %v1147
  %v1155 = vadd.f32 %v1140, %v1147
  %v1156 = vadd.f32 %v1143, %v1147
  %v1165 = vlaneseq
  %v1166 = vand.u32 %v1165, 127
  %v1167 = vperm.slane %v1149, %v1166
  %v1168 = vperm.slane %v1150, %v1166
  %v1169 = vperm.slane %v1151, %v1166
  %v1170 = vperm.slane %v1152, %v1166
  %v1171 = vperm.slane %v1153, %v1166
  %v1172 = vperm.slane %v1154, %v1166
  %v1173 = vperm.slane %v1155, %v1166
  %v1174 = vperm.slane %v1156, %v1166
  %vm1175 = vcmask 1041409
  %v1176 = vsel %vm1175, %v1168, %v1167
  %vm1177 = vcmask 1042434
  %v1178 = vsel %vm1177, %v1169, %v1176
  %vm1179 = vcmask 1043459
  %v1180 = vsel %vm1179, %v1170, %v1178
  %vm1181 = vcmask 1044484
  %v1182 = vsel %vm1181, %v1171, %v1180
  %vm1183 = vcmask 1045509
  %v1184 = vsel %vm1183, %v1172, %v1182
  %vm1185 = vcmask 1046534
  %v1186 = vsel %vm1185, %v1173, %v1184
  %vm1187 = vcmask 1047559
  %v1188 = vsel %vm1187, %v1174, %v1186
  %vm1190 = vcmask 15360
  %1191 = vst.msk [vmem:[%s3] sm:$0xff] %vm1190, %v1188
  // Predicated region
  $region14: #{encoder_decoder_fc_forward.1} parent=0 // pred_check
    _
  $region15: #{encoder_decoder_fc_forward.1} parent=0 // pred_check_branch
    %1193 = sbr.rel (0) target = $region17
  $region16: #{encoder_decoder_fc_forward.1} parent=0 // pred_region
    _
  $region17: #{encoder_decoder_fc_forward.1} parent=0 // pred_fallthru
    _
  // Predicated region
  $region18: #{encoder_decoder_fc_forward.1} parent=0 // pred_check
    _
  $region19: #{encoder_decoder_fc_forward.1} parent=0 // pred_check_branch
    %1195 = sbr.rel (0) target = $region21
  $region20: #{encoder_decoder_fc_forward.1} parent=0 // pred_region
    _
  $region21: #{encoder_decoder_fc_forward.1} parent=0 // pred_fallthru
    _

</llo_original>
